<compile_context>
chip_gen: v7x
topology: tpu7x:2x2x1
jax: 0.10.0
libtpu: 0.0.40
codegen_flags: <defaults>
</compile_context>

<pallas_src>
import jax
import jax.numpy as jnp
from jax import lax
from jax.experimental import pallas as pl
from jax.experimental.pallas import tpu as pltpu


def _round_up(x, m):
    return (x + m - 1) // m * m


def _device_kind():
    try:
        return jax.devices()[0].device_kind.lower()
    except Exception:
        return ""


def _default_tile_b():
    # v5e: 1 vector-store slot / no bf16 VALU -> cap the tile; v6e/v7x take 2048.
    kind = _device_kind()
    if "v5" in kind:
        return 1024
    return 2048


def _is_v7x():
    kind = _device_kind()
    return ("7x" in kind) or ("v7" in kind)


def mlp_kernel(x_ref, w1_ref, w2_ref, w3_ref, w4_ref, b_ref, o_ref):
    n1 = w1_ref.shape[1]
    n2 = w2_ref.shape[1]
    n3 = w3_ref.shape[1]

    bias = b_ref[...]            # (4, >=128) f32; row r holds layer r+1's bias
    b1 = bias[0:1, 0:n1]
    b2 = bias[1:2, 0:n2]
    b3 = bias[2:3, 0:n3]
    b4 = bias[3:4, 0:1]

    # x arrives f32 from HBM (single pass); cast to bf16 in-kernel for the MXU.
    x = x_ref[...].astype(jnp.bfloat16)

    # fc1 + ReLU (dropout is identity at inference)
    h = jnp.dot(x, w1_ref[...], preferred_element_type=jnp.float32)
    h = jnp.maximum(h + b1, 0.0).astype(jnp.bfloat16)
    # fc2 + ReLU
    h = jnp.dot(h, w2_ref[...], preferred_element_type=jnp.float32)
    h = jnp.maximum(h + b2, 0.0).astype(jnp.bfloat16)
    # fc3 + ReLU (bf16 so the head dot is a bf16 x bf16 MXU op)
    h = jnp.dot(h, w3_ref[...], preferred_element_type=jnp.float32)
    h = jnp.maximum(h + b3, 0.0).astype(jnp.bfloat16)
    # fc4: contract w4_row (1, n3) with h (tile_b, n3) over the last dim.
    # Avoids the degenerate N=1 matmul and yields a lane-dense (1, tile_b) row.
    row = lax.dot_general(
        w4_ref[...], h,
        dimension_numbers=(((1,), (1,)), ((), ())),
        preferred_element_type=jnp.float32)          # (1, tile_b) f32
    o_ref[...] = row + b4


def prepare_params(params):
    """One-time (model-load) packing: bf16 w1..w3, w4 as a (1, n3) bf16 row,
    and all four biases packed into a single (4, >=128) f32 array."""
    w1, b1 = params["w1"], params["b1"]
    w2, b2 = params["w2"], params["b2"]
    w3, b3 = params["w3"], params["b3"]
    w4, b4 = params["w4"], params["b4"]
    n1, n2, n3 = w1.shape[1], w2.shape[1], w3.shape[1]

    bias_w = _round_up(max(n1, n2, n3, 1), 128)
    bias_pack = jnp.zeros((4, bias_w), jnp.float32)
    bias_pack = bias_pack.at[0, :n1].set(b1.reshape(-1))
    bias_pack = bias_pack.at[1, :n2].set(b2.reshape(-1))
    bias_pack = bias_pack.at[2, :n3].set(b3.reshape(-1))
    bias_pack = bias_pack.at[3, :1].set(b4.reshape(-1))

    return {
        "w1": w1.astype(jnp.bfloat16),
        "w2": w2.astype(jnp.bfloat16),
        "w3": w3.astype(jnp.bfloat16),
        "w4_row": w4.reshape(1, n3).astype(jnp.bfloat16),
        "bias_pack": bias_pack,
    }


def house_price_nn_deep(x, prepared, tile_b=None):
    """x: (B, input_dim) f32. prepared: output of prepare_params()."""
    B, d_in = x.shape
    w1, w2, w3 = prepared["w1"], prepared["w2"], prepared["w3"]
    w4_row, bias_pack = prepared["w4_row"], prepared["bias_pack"]
    assert w1.shape[0] == d_in

    if x.dtype != jnp.float32:
        x = x.astype(jnp.float32)

    # ---- batch tiling (pad B up to a multiple of the tile) ----
    if tile_b is None:
        tile_b = _default_tile_b()
    tile_b = _round_up(min(tile_b, _round_up(B, 8)), 8)
    b_pad = _round_up(B, tile_b)
    if b_pad != B:
        x = jnp.pad(x, ((0, b_pad - B), (0, 0)))
    num_tiles = b_pad // tile_b

    # v7x: split the batch grid across the two TensorCores when there is work
    # for both; elsewhere plain "parallel" (near-zero effect, but harmless).
    if _is_v7x() and num_tiles >= 2:
        dim_sem = (pltpu.CORE_PARALLEL,)
    else:
        dim_sem = ("parallel",)

    # Weights/biases: full-array blocks with a constant index_map -> VMEM-resident.
    resident = lambda a: pl.BlockSpec(a.shape, lambda i: (0,) * a.ndim)

    out = pl.pallas_call(
        mlp_kernel,
        out_shape=jax.ShapeDtypeStruct((num_tiles, tile_b), jnp.float32),
        grid=(num_tiles,),
        in_specs=[
            pl.BlockSpec((tile_b, d_in), lambda i: (i, 0)),   # streamed f32 x tile
            resident(w1), resident(w2), resident(w3),
            resident(w4_row), resident(bias_pack),
        ],
        out_specs=pl.BlockSpec((1, tile_b), lambda i: (i, 0)),  # lane-dense row
        compiler_params=pltpu.CompilerParams(dimension_semantics=dim_sem),
    )(x, w1, w2, w3, w4_row, bias_pack)

    # (num_tiles, tile_b) lane-dense slab -> (B, 1) column expected by the module.
    return out.reshape(b_pad, 1)[:B]


def init_params(key, input_dim, hidden1=128, hidden2=64, hidden3=32):
    """PyTorch-Linear-style init: U(-1/sqrt(fan_in), 1/sqrt(fan_in))."""
    dims = [(input_dim, hidden1), (hidden1, hidden2), (hidden2, hidden3), (hidden3, 1)]
    params = {}
    for i, (fan_in, fan_out) in enumerate(dims, start=1):
        key, kw, kb = jax.random.split(key, 3)
        bound = 1.0 / (fan_in ** 0.5)
        params[f"w{i}"] = jax.random.uniform(
            kw, (fan_in, fan_out), jnp.float32, minval=-bound, maxval=bound)
        params[f"b{i}"] = jax.random.uniform(
            kb, (1, fan_out), jnp.float32, minval=-bound, maxval=bound)
    return params


def reference(x, params):
    h = jnp.maximum(x @ params["w1"] + params["b1"], 0.0)
    h = jnp.maximum(h @ params["w2"] + params["b2"], 0.0)
    h = jnp.maximum(h @ params["w3"] + params["b3"], 0.0)
    return h @ params["w4"] + params["b4"]


if __name__ == "__main__":
    key = jax.random.PRNGKey(0)
    input_dim = 32
    k_x, k_p = jax.random.split(key)

    params = init_params(k_p, input_dim)
    prepared = prepare_params(params)          # hoisted, one-time packing

    # bf16 operands with f32 accumulation vs. f32 reference -> loosened tolerance.
    atol = rtol = 5e-2

    # (a) Default (large) tile: single grid step at this small batch.
    x = jax.random.normal(k_x, (512, input_dim), jnp.float32)
    ref = reference(x, params)
    out = jax.block_until_ready(house_price_nn_deep(x, prepared))
    assert out.shape == (512, 1)
    assert jnp.allclose(out, ref, atol=atol, rtol=rtol)

    # (b) Forced small tile: exercises the multi-step pipeline (and the v7x
    #     core-parallel path when running on a 2-TensorCore chip).
    out_tiled = jax.block_until_ready(house_price_nn_deep(x, prepared, tile_b=128))
    assert jnp.allclose(out_tiled, ref, atol=atol, rtol=rtol)

    # (c) Non-power-of-two batch: exercises the 8-row rounding / padding path.
    x_small = jax.random.normal(k_x, (40, input_dim), jnp.float32)
    ref_small = reference(x_small, params)
    out_small = jax.block_until_ready(house_price_nn_deep(x_small, prepared))
    assert out_small.shape == (40, 1)
    assert jnp.allclose(out_small, ref_small, atol=atol, rtol=rtol)

    print("KERNEL_OK")
</pallas_src>

<mosaic_0001>
module attributes {stable_mosaic.version = 11 : i64} {
  func.func @mlp_kernel(%arg0: i32, %arg1: memref<512x32xf32, #tpu.memory_space<vmem>>, %arg2: memref<32x128xbf16, #tpu.memory_space<vmem>>, %arg3: memref<128x64xbf16, #tpu.memory_space<vmem>>, %arg4: memref<64x32xbf16, #tpu.memory_space<vmem>>, %arg5: memref<1x32xbf16, #tpu.memory_space<vmem>>, %arg6: memref<4x128xf32, #tpu.memory_space<vmem>>, %arg7: memref<1x512xf32, #tpu.memory_space<vmem>>) attributes {dimension_semantics = [#tpu.dimension_semantics<parallel>], iteration_bounds = array<i64: 1>, scalar_prefetch = 0 : i64, scratch_operands = 0 : i64, tpu.core_type = #tpu.core_type<tc>, window_params = [{transform_indices = @transform_0, window_bounds = array<i64: 512, 32>}, {pipeline_mode = #tpu.pipeline_mode<synchronous>, transform_indices = @transform_1, window_bounds = array<i64: 32, 128>}, {pipeline_mode = #tpu.pipeline_mode<synchronous>, transform_indices = @transform_2, window_bounds = array<i64: 128, 64>}, {pipeline_mode = #tpu.pipeline_mode<synchronous>, transform_indices = @transform_3, window_bounds = array<i64: 64, 32>}, {pipeline_mode = #tpu.pipeline_mode<synchronous>, transform_indices = @transform_4, window_bounds = array<i64: 1, 32>}, {pipeline_mode = #tpu.pipeline_mode<synchronous>, transform_indices = @transform_5, window_bounds = array<i64: 4, 128>}, {transform_indices = @transform_6, window_bounds = array<i64: 1, 512>}]} {
    %c0 = arith.constant 0 : index
    %c0_0 = arith.constant 0 : index
    %0 = vector.load %arg6[%c0, %c0_0] : memref<4x128xf32, #tpu.memory_space<vmem>>, vector<4x128xf32>
    %1 = vector.extract_strided_slice %0 {offsets = [0, 0], sizes = [1, 128], strides = [1, 1]} : vector<4x128xf32> to vector<1x128xf32>
    %2 = vector.extract_strided_slice %0 {offsets = [1, 0], sizes = [1, 64], strides = [1, 1]} : vector<4x128xf32> to vector<1x64xf32>
    %3 = vector.extract_strided_slice %0 {offsets = [2, 0], sizes = [1, 32], strides = [1, 1]} : vector<4x128xf32> to vector<1x32xf32>
    %4 = vector.extract_strided_slice %0 {offsets = [3, 0], sizes = [1, 1], strides = [1, 1]} : vector<4x128xf32> to vector<1x1xf32>
    %c0_1 = arith.constant 0 : index
    %c0_2 = arith.constant 0 : index
    %5 = vector.load %arg1[%c0_1, %c0_2] : memref<512x32xf32, #tpu.memory_space<vmem>>, vector<512x32xf32>
    %6 = arith.truncf %5 : vector<512x32xf32> to vector<512x32xbf16>
    %c0_3 = arith.constant 0 : index
    %c0_4 = arith.constant 0 : index
    %7 = vector.load %arg2[%c0_3, %c0_4] : memref<32x128xbf16, #tpu.memory_space<vmem>>, vector<32x128xbf16>
    %cst = arith.constant dense<0.000000e+00> : vector<512x128xf32>
    %8 = tpu.matmul %6, %7, %cst {dimension_numbers = #tpu.dot_dimension_numbers<[1], [0], [0], [1], [0, 0, 1, 1], [], []>} : vector<512x32xbf16>, vector<32x128xbf16>, vector<512x128xf32> -> vector<512x128xf32>
    %9 = vector.broadcast %1 : vector<1x128xf32> to vector<512x128xf32>
    %10 = arith.addf %8, %9 : vector<512x128xf32>
    %cst_5 = arith.constant 0.000000e+00 : f32
    %11 = vector.broadcast %cst_5 : f32 to vector<512x128xf32>
    %12 = arith.maximumf %10, %11 : vector<512x128xf32>
    %13 = arith.truncf %12 : vector<512x128xf32> to vector<512x128xbf16>
    %c0_6 = arith.constant 0 : index
    %c0_7 = arith.constant 0 : index
    %14 = vector.load %arg3[%c0_6, %c0_7] : memref<128x64xbf16, #tpu.memory_space<vmem>>, vector<128x64xbf16>
    %cst_8 = arith.constant dense<0.000000e+00> : vector<512x64xf32>
    %15 = tpu.matmul %13, %14, %cst_8 {dimension_numbers = #tpu.dot_dimension_numbers<[1], [0], [0], [1], [0, 0, 1, 1], [], []>} : vector<512x128xbf16>, vector<128x64xbf16>, vector<512x64xf32> -> vector<512x64xf32>
    %16 = vector.broadcast %2 : vector<1x64xf32> to vector<512x64xf32>
    %17 = arith.addf %15, %16 : vector<512x64xf32>
    %cst_9 = arith.constant 0.000000e+00 : f32
    %18 = vector.broadcast %cst_9 : f32 to vector<512x64xf32>
    %19 = arith.maximumf %17, %18 : vector<512x64xf32>
    %20 = arith.truncf %19 : vector<512x64xf32> to vector<512x64xbf16>
    %c0_10 = arith.constant 0 : index
    %c0_11 = arith.constant 0 : index
    %21 = vector.load %arg4[%c0_10, %c0_11] : memref<64x32xbf16, #tpu.memory_space<vmem>>, vector<64x32xbf16>
    %cst_12 = arith.constant dense<0.000000e+00> : vector<512x32xf32>
    %22 = tpu.matmul %20, %21, %cst_12 {dimension_numbers = #tpu.dot_dimension_numbers<[1], [0], [0], [1], [0, 0, 1, 1], [], []>} : vector<512x64xbf16>, vector<64x32xbf16>, vector<512x32xf32> -> vector<512x32xf32>
    %23 = vector.broadcast %3 : vector<1x32xf32> to vector<512x32xf32>
    %24 = arith.addf %22, %23 : vector<512x32xf32>
    %cst_13 = arith.constant 0.000000e+00 : f32
    %25 = vector.broadcast %cst_13 : f32 to vector<512x32xf32>
    %26 = arith.maximumf %24, %25 : vector<512x32xf32>
    %27 = arith.truncf %26 : vector<512x32xf32> to vector<512x32xbf16>
    %c0_14 = arith.constant 0 : index
    %c0_15 = arith.constant 0 : index
    %28 = vector.load %arg5[%c0_14, %c0_15] : memref<1x32xbf16, #tpu.memory_space<vmem>>, vector<1x32xbf16>
    %cst_16 = arith.constant dense<0.000000e+00> : vector<1x512xf32>
    %29 = tpu.matmul %28, %27, %cst_16 {dimension_numbers = #tpu.dot_dimension_numbers<[1], [1], [0], [0], [0, 0, 1, 0], [], []>} : vector<1x32xbf16>, vector<512x32xbf16>, vector<1x512xf32> -> vector<1x512xf32>
    %30 = vector.broadcast %4 : vector<1x1xf32> to vector<1x512xf32>
    %31 = arith.addf %29, %30 : vector<1x512xf32>
    %c0_17 = arith.constant 0 : index
    %c0_18 = arith.constant 0 : index
    %32 = vector.load %arg7[%c0_17, %c0_18] : memref<1x512xf32, #tpu.memory_space<vmem>>, vector<1x512xf32>
    tpu.vector_store %arg7[%c0_17, %c0_18], %31 {strides = array<i32>} : memref<1x512xf32, #tpu.memory_space<vmem>>, vector<1x512xf32>,
    return
  }
  func.func @transform_0(%arg0: i32) -> (i32, i32) {
    %c0_i32 = arith.constant 0 : i32
    %c0_i32_0 = arith.constant 0 : i32
    return %arg0, %c0_i32 : i32, i32
  }
  func.func @transform_1(%arg0: i32) -> (i32, i32) {
    %c0_i32 = arith.constant 0 : i32
    %c0_i32_0 = arith.constant 0 : i32
    %c0_i32_1 = arith.constant 0 : i32
    return %c0_i32, %c0_i32_0 : i32, i32
  }
  func.func @transform_2(%arg0: i32) -> (i32, i32) {
    %c0_i32 = arith.constant 0 : i32
    %c0_i32_0 = arith.constant 0 : i32
    %c0_i32_1 = arith.constant 0 : i32
    return %c0_i32, %c0_i32_0 : i32, i32
  }
  func.func @transform_3(%arg0: i32) -> (i32, i32) {
    %c0_i32 = arith.constant 0 : i32
    %c0_i32_0 = arith.constant 0 : i32
    %c0_i32_1 = arith.constant 0 : i32
    return %c0_i32, %c0_i32_0 : i32, i32
  }
  func.func @transform_4(%arg0: i32) -> (i32, i32) {
    %c0_i32 = arith.constant 0 : i32
    %c0_i32_0 = arith.constant 0 : i32
    %c0_i32_1 = arith.constant 0 : i32
    return %c0_i32, %c0_i32_0 : i32, i32
  }
  func.func @transform_5(%arg0: i32) -> (i32, i32) {
    %c0_i32 = arith.constant 0 : i32
    %c0_i32_0 = arith.constant 0 : i32
    %c0_i32_1 = arith.constant 0 : i32
    return %c0_i32, %c0_i32_0 : i32, i32
  }
  func.func @transform_6(%arg0: i32) -> (i32, i32) {
    %c0_i32 = arith.constant 0 : i32
    %c0_i32_0 = arith.constant 0 : i32
    return %arg0, %c0_i32 : i32, i32
  }
}

</mosaic_0001>

<llo_original>
// kernel: tpu_custom_call.1
$region0: #{tpu_custom_call.1}
  #allocation0 [shape = 'u32[]', space=smem, size = 0x4, offset = 0x4, fixed_abs, tag = 'smem constant byte address 0x4 - core index']
  #allocation1 [shape = 'u32[144,128]{1,0:T(1,128)}', space=vmem, size = 0x12000, scoped, tag = 'internal scratch']
  %s0 = inlined_call_operand.vmem [shape: f32[512,32], index: 0, kind: input, shape index: {}]
  %s1 = inlined_call_operand.vmem [shape: bf16[32,128], index: 1, kind: input, shape index: {}]
  %s2 = inlined_call_operand.vmem [shape: bf16[128,64], index: 2, kind: input, shape index: {}]
  %s3 = inlined_call_operand.vmem [shape: bf16[64,32], index: 3, kind: input, shape index: {}]
  %s4 = inlined_call_operand.vmem [shape: bf16[1,32], index: 4, kind: input, shape index: {}]
  %s5 = inlined_call_operand.vmem [shape: f32[4,128], index: 5, kind: input, shape index: {}]
  %s6 = inlined_call_operand.hbm [shape: f32[1,512], index: 6, kind: output, shape index: {}]
  %s7 = sld [smem:[#allocation0]]
  $region34: #{tpu_custom_call.1} parent=0
    _
  %s9 = ssub.s32 1, %s7
  %s10 = scalar_select 0, %s9, %s7
  $region1: #{tpu_custom_call.1} parent=0
    #allocation2 [shape = 'u8[2048]{0}', space=vmem, size = 0x800, scoped, tag = 'output window, operand 0, single buffered']
    #allocation3 [shape = 's32[1]{0}', space=sflag, size = 0x4, scoped, tag = 'scoped memory for tpu_custom_call.1']
    %11 = vsyncpa [#allocation3], 0
    // Predicated region
    $region2: #{tpu_custom_call.1} parent=1 // pred_check
      _
    $region3: #{tpu_custom_call.1} parent=1 // pred_check_branch
      %13 = sbr.rel (0) target = $region5
    $region4: #{tpu_custom_call.1} parent=1 // pred_region
      _
    $region5: #{tpu_custom_call.1} parent=1 // pred_fallthru
      _
    // Predicated region
    $region6: #{tpu_custom_call.1} parent=1 // pred_check
      _
    $region7: #{tpu_custom_call.1} parent=1 // pred_check_branch
      %15 = sbr.rel (0) target = $region9
    $region8: #{tpu_custom_call.1} parent=1 // pred_region
      _
    $region9: #{tpu_custom_call.1} parent=1 // pred_fallthru
      _
    // Predicated region
    $region10: #{tpu_custom_call.1} parent=1 // pred_check
      _
    $region11: #{tpu_custom_call.1} parent=1 // pred_check_branch
      %17 = sbr.rel (0) target = $region13
    $region12: #{tpu_custom_call.1} parent=1 // pred_region
      _
    $region13: #{tpu_custom_call.1} parent=1 // pred_fallthru
      _
    // Predicated region
    $region14: #{tpu_custom_call.1} parent=1 // pred_check
      _
    $region15: #{tpu_custom_call.1} parent=1 // pred_check_branch
      %19 = sbr.rel (0) target = $region17
    $region16: #{tpu_custom_call.1} parent=1 // pred_region
      _
    $region17: #{tpu_custom_call.1} parent=1 // pred_fallthru
      _
    // Predicated region
    $region18: #{tpu_custom_call.1} parent=1 // pred_check
      _
    $region19: #{tpu_custom_call.1} parent=1 // pred_check_branch
      %21 = sbr.rel (0) target = $region21
    $region20: #{tpu_custom_call.1} parent=1 // pred_region
      _
    $region21: #{tpu_custom_call.1} parent=1 // pred_fallthru
      _
    // Predicated region
    $region22: #{tpu_custom_call.1} parent=1 // pred_check
      _
    $region23: #{tpu_custom_call.1} parent=1 // pred_check_branch
      %23 = sbr.rel (0) target = $region25
    $region24: #{tpu_custom_call.1} parent=1 // pred_region
      _
    $region25: #{tpu_custom_call.1} parent=1 // pred_fallthru
      _
    %v25 = vld [vmem:[%s5] sm:$0xf]
    %v26 = vld [vmem:[%s0] sm:$0xff]
    %v27 = vld [vmem:[%s0 + $0x8] sm:$0xff]
    %v28 = vld [vmem:[%s0 + $0x10] sm:$0xff]
    %v29 = vld [vmem:[%s0 + $0x18] sm:$0xff]
    %v30 = vld [vmem:[%s0 + $0x20] sm:$0xff]
    %v31 = vld [vmem:[%s0 + $0x28] sm:$0xff]
    %v32 = vld [vmem:[%s0 + $0x30] sm:$0xff]
    %v33 = vld [vmem:[%s0 + $0x38] sm:$0xff]
    %v34 = vld [vmem:[%s0 + $0x40] sm:$0xff]
    %v35 = vld [vmem:[%s0 + $0x48] sm:$0xff]
    %v36 = vld [vmem:[%s0 + $0x50] sm:$0xff]
    %v37 = vld [vmem:[%s0 + $0x58] sm:$0xff]
    %v38 = vld [vmem:[%s0 + $0x60] sm:$0xff]
    %v39 = vld [vmem:[%s0 + $0x68] sm:$0xff]
    %v40 = vld [vmem:[%s0 + $0x70] sm:$0xff]
    %v41 = vld [vmem:[%s0 + $0x78] sm:$0xff]
    %v42 = vld [vmem:[%s0 + $0x80] sm:$0xff]
    %v43 = vld [vmem:[%s0 + $0x88] sm:$0xff]
    %v44 = vld [vmem:[%s0 + $0x90] sm:$0xff]
    %v45 = vld [vmem:[%s0 + $0x98] sm:$0xff]
    %v46 = vld [vmem:[%s0 + $0xa0] sm:$0xff]
    %v47 = vld [vmem:[%s0 + $0xa8] sm:$0xff]
    %v48 = vld [vmem:[%s0 + $0xb0] sm:$0xff]
    %v49 = vld [vmem:[%s0 + $0xb8] sm:$0xff]
    %v50 = vld [vmem:[%s0 + $0xc0] sm:$0xff]
    %v51 = vld [vmem:[%s0 + $0xc8] sm:$0xff]
    %v52 = vld [vmem:[%s0 + $0xd0] sm:$0xff]
    %v53 = vld [vmem:[%s0 + $0xd8] sm:$0xff]
    %v54 = vld [vmem:[%s0 + $0xe0] sm:$0xff]
    %v55 = vld [vmem:[%s0 + $0xe8] sm:$0xff]
    %v56 = vld [vmem:[%s0 + $0xf0] sm:$0xff]
    %v57 = vld [vmem:[%s0 + $0xf8] sm:$0xff]
    %v58 = vld [vmem:[%s0 + $0x100] sm:$0xff]
    %v59 = vld [vmem:[%s0 + $0x108] sm:$0xff]
    %v60 = vld [vmem:[%s0 + $0x110] sm:$0xff]
    %v61 = vld [vmem:[%s0 + $0x118] sm:$0xff]
    %v62 = vld [vmem:[%s0 + $0x120] sm:$0xff]
    %v63 = vld [vmem:[%s0 + $0x128] sm:$0xff]
    %v64 = vld [vmem:[%s0 + $0x130] sm:$0xff]
    %v65 = vld [vmem:[%s0 + $0x138] sm:$0xff]
    %v66 = vld [vmem:[%s0 + $0x140] sm:$0xff]
    %v67 = vld [vmem:[%s0 + $0x148] sm:$0xff]
    %v68 = vld [vmem:[%s0 + $0x150] sm:$0xff]
    %v69 = vld [vmem:[%s0 + $0x158] sm:$0xff]
    %v70 = vld [vmem:[%s0 + $0x160] sm:$0xff]
    %v71 = vld [vmem:[%s0 + $0x168] sm:$0xff]
    %v72 = vld [vmem:[%s0 + $0x170] sm:$0xff]
    %v73 = vld [vmem:[%s0 + $0x178] sm:$0xff]
    %v74 = vld [vmem:[%s0 + $0x180] sm:$0xff]
    %v75 = vld [vmem:[%s0 + $0x188] sm:$0xff]
    %v76 = vld [vmem:[%s0 + $0x190] sm:$0xff]
    %v77 = vld [vmem:[%s0 + $0x198] sm:$0xff]
    %v78 = vld [vmem:[%s0 + $0x1a0] sm:$0xff]
    %v79 = vld [vmem:[%s0 + $0x1a8] sm:$0xff]
    %v80 = vld [vmem:[%s0 + $0x1b0] sm:$0xff]
    %v81 = vld [vmem:[%s0 + $0x1b8] sm:$0xff]
    %v82 = vld [vmem:[%s0 + $0x1c0] sm:$0xff]
    %v83 = vld [vmem:[%s0 + $0x1c8] sm:$0xff]
    %v84 = vld [vmem:[%s0 + $0x1d0] sm:$0xff]
    %v85 = vld [vmem:[%s0 + $0x1d8] sm:$0xff]
    %v86 = vld [vmem:[%s0 + $0x1e0] sm:$0xff]
    %v87 = vld [vmem:[%s0 + $0x1e8] sm:$0xff]
    %v88 = vld [vmem:[%s0 + $0x1f0] sm:$0xff]
    %v89 = vld [vmem:[%s0 + $0x1f8] sm:$0xff]
    %v90 = vpack.c.bf16 %v27, %v26
    %v91 = vpack.c.bf16 %v29, %v28
    %v92 = vpack.c.bf16 %v31, %v30
    %v93 = vpack.c.bf16 %v33, %v32
    %v94 = vpack.c.bf16 %v35, %v34
    %v95 = vpack.c.bf16 %v37, %v36
    %v96 = vpack.c.bf16 %v39, %v38
    %v97 = vpack.c.bf16 %v41, %v40
    %v98 = vpack.c.bf16 %v43, %v42
    %v99 = vpack.c.bf16 %v45, %v44
    %v100 = vpack.c.bf16 %v47, %v46
    %v101 = vpack.c.bf16 %v49, %v48
    %v102 = vpack.c.bf16 %v51, %v50
    %v103 = vpack.c.bf16 %v53, %v52
    %v104 = vpack.c.bf16 %v55, %v54
    %v105 = vpack.c.bf16 %v57, %v56
    %v106 = vpack.c.bf16 %v59, %v58
    %v107 = vpack.c.bf16 %v61, %v60
    %v108 = vpack.c.bf16 %v63, %v62
    %v109 = vpack.c.bf16 %v65, %v64
    %v110 = vpack.c.bf16 %v67, %v66
    %v111 = vpack.c.bf16 %v69, %v68
    %v112 = vpack.c.bf16 %v71, %v70
    %v113 = vpack.c.bf16 %v73, %v72
    %v114 = vpack.c.bf16 %v75, %v74
    %v115 = vpack.c.bf16 %v77, %v76
    %v116 = vpack.c.bf16 %v79, %v78
    %v117 = vpack.c.bf16 %v81, %v80
    %v118 = vpack.c.bf16 %v83, %v82
    %v119 = vpack.c.bf16 %v85, %v84
    %v120 = vpack.c.bf16 %v87, %v86
    %v121 = vpack.c.bf16 %v89, %v88
    %v122 = vld [vmem:[%s1] sm:$0xf]
    %v123 = vld [vmem:[%s1 + $0x4] sm:$0xf]
    %v124 = vld [vmem:[%s1 + $0x8] sm:$0xf]
    %v125 = vld [vmem:[%s1 + $0xc] sm:$0xf]
    %v126 = vlaneseq
    %v127 = vshrl.u32 %v126, 7
    %v128 = vsub.s32 0, %v127
    %v129 = vrot.slane %v25, %v128
    %v134 = vunpack.c.l.b16 %v122
    %v135 = vunpack.c.l.b16 %v123
    %v136 = vunpack.c.l.b16 %v124
    %v137 = vunpack.c.l.b16 %v125
    %v138 = vpack.c.b16 %v135, %v134
    %v139 = vpack.c.b16 %v137, %v136
    %vm142 = vcmask 261120
    %v144 = vsel %vm142, %v90, 0
    %v147 = vsel %vm142, %v91, 0
    %v150 = vsel %vm142, %v92, 0
    %v153 = vsel %vm142, %v93, 0
    %v156 = vsel %vm142, %v94, 0
    %v159 = vsel %vm142, %v95, 0
    %v162 = vsel %vm142, %v96, 0
    %v165 = vsel %vm142, %v97, 0
    %v168 = vsel %vm142, %v98, 0
    %v171 = vsel %vm142, %v99, 0
    %v174 = vsel %vm142, %v100, 0
    %v177 = vsel %vm142, %v101, 0
    %v180 = vsel %vm142, %v102, 0
    %v183 = vsel %vm142, %v103, 0
    %v186 = vsel %vm142, %v104, 0
    %v189 = vsel %vm142, %v105, 0
    %v192 = vsel %vm142, %v106, 0
    %v195 = vsel %vm142, %v107, 0
    %v198 = vsel %vm142, %v108, 0
    %v201 = vsel %vm142, %v109, 0
    %v204 = vsel %vm142, %v110, 0
    %v207 = vsel %vm142, %v111, 0
    %v210 = vsel %vm142, %v112, 0
    %v213 = vsel %vm142, %v113, 0
    %v216 = vsel %vm142, %v114, 0
    %v219 = vsel %vm142, %v115, 0
    %v222 = vsel %vm142, %v116, 0
    %v225 = vsel %vm142, %v117, 0
    %v228 = vsel %vm142, %v118, 0
    %v231 = vsel %vm142, %v119, 0
    %v234 = vsel %vm142, %v120, 0
    %v237 = vsel %vm142, %v121, 0
    %239 = vmatprep.subr.bf16.mxu0 0
    %240 = vmatpush1.bf16.msra.mxu0 %v138
    %241 = vmatprep.subr.bf16.mxu0 0
    %242 = vmatpush1.bf16.msra.mxu0 %v139
    %243 = vmatprep.subr.bf16.mxu0 0
    %244 = vmatpush1.bf16.msra.mxu0 0
    %245 = vmatprep.subr.bf16.mxu0 0
    %246 = vmatpush1.bf16.msra.mxu0 0
    %247 = vmatprep.subr.bf16.mxu0 0
    %248 = vmatpush1.bf16.msra.mxu0 0
    %249 = vmatprep.subr.bf16.mxu0 0
    %250 = vmatpush1.bf16.msra.mxu0 0
    %251 = vmatprep.subr.bf16.mxu0 0
    %252 = vmatpush1.bf16.msra.mxu0 0
    %253 = vmatprep.subr.bf16.mxu0 0
    %254 = vmatpush1.bf16.msra.mxu0 0
    %255 = vmatprep.subr.bf16.mxu0 0
    %256 = vmatpush1.bf16.msra.mxu0 0
    %257 = vmatprep.subr.bf16.mxu0 0
    %258 = vmatpush1.bf16.msra.mxu0 0
    %259 = vmatprep.subr.bf16.mxu0 0
    %260 = vmatpush1.bf16.msra.mxu0 0
    %261 = vmatprep.subr.bf16.mxu0 0
    %262 = vmatpush1.bf16.msra.mxu0 0
    %263 = vmatprep.subr.bf16.mxu0 0
    %264 = vmatpush1.bf16.msra.mxu0 0
    %265 = vmatprep.subr.bf16.mxu0 0
    %266 = vmatpush1.bf16.msra.mxu0 0
    %267 = vmatprep.subr.bf16.mxu0 0
    %268 = vmatpush1.bf16.msra.mxu0 0
    %269 = vmatprep.subr.bf16.mxu0 0
    %270 = vmatpush1.bf16.msra.mxu0 0
    %271 = vmatprep.mubr.bf16.mxu0 0
    %272 = vmatmul.mubr.bf16.gmra.mrb[0].mxu0 %v144
    %v273 = vpop.f32.mrb[0].mxu0
    %v274 = vadd.f32 %v129, %v273
    %v275 = vpop.f32.mrb[0].mxu0
    %v276 = vpop.f32.mrb[0].mxu0
    %v277 = vadd.f32 %v129, %v276
    %v278 = vpop.f32.mrb[0].mxu0
    %279 = vmatprep.mubr.bf16.mxu0 0
    %280 = vmatmul.mubr.bf16.gmra.mrb[0].mxu0 %v147
    %v281 = vpop.f32.mrb[0].mxu0
    %v282 = vadd.f32 %v129, %v281
    %v283 = vpop.f32.mrb[0].mxu0
    %v284 = vpop.f32.mrb[0].mxu0
    %v285 = vadd.f32 %v129, %v284
    %v286 = vpop.f32.mrb[0].mxu0
    %287 = vmatprep.mubr.bf16.mxu0 0
    %288 = vmatmul.mubr.bf16.gmra.mrb[0].mxu0 %v150
    %v289 = vpop.f32.mrb[0].mxu0
    %v290 = vadd.f32 %v129, %v289
    %v291 = vpop.f32.mrb[0].mxu0
    %v292 = vpop.f32.mrb[0].mxu0
    %v293 = vadd.f32 %v129, %v292
    %v294 = vpop.f32.mrb[0].mxu0
    %295 = vmatprep.mubr.bf16.mxu0 0
    %296 = vmatmul.mubr.bf16.gmra.mrb[0].mxu0 %v153
    %v297 = vpop.f32.mrb[0].mxu0
    %v298 = vadd.f32 %v129, %v297
    %v299 = vpop.f32.mrb[0].mxu0
    %v300 = vpop.f32.mrb[0].mxu0
    %v301 = vadd.f32 %v129, %v300
    %v302 = vpop.f32.mrb[0].mxu0
    %303 = vmatprep.mubr.bf16.mxu0 0
    %304 = vmatmul.mubr.bf16.gmra.mrb[0].mxu0 %v156
    %v305 = vpop.f32.mrb[0].mxu0
    %v306 = vadd.f32 %v129, %v305
    %v307 = vpop.f32.mrb[0].mxu0
    %v308 = vpop.f32.mrb[0].mxu0
    %v309 = vadd.f32 %v129, %v308
    %v310 = vpop.f32.mrb[0].mxu0
    %311 = vmatprep.mubr.bf16.mxu0 0
    %312 = vmatmul.mubr.bf16.gmra.mrb[0].mxu0 %v159
    %v313 = vpop.f32.mrb[0].mxu0
    %v314 = vadd.f32 %v129, %v313
    %v315 = vpop.f32.mrb[0].mxu0
    %v316 = vpop.f32.mrb[0].mxu0
    %v317 = vadd.f32 %v129, %v316
    %v318 = vpop.f32.mrb[0].mxu0
    %319 = vmatprep.mubr.bf16.mxu0 0
    %320 = vmatmul.mubr.bf16.gmra.mrb[0].mxu0 %v162
    %v321 = vpop.f32.mrb[0].mxu0
    %v322 = vadd.f32 %v129, %v321
    %v323 = vpop.f32.mrb[0].mxu0
    %v324 = vpop.f32.mrb[0].mxu0
    %v325 = vadd.f32 %v129, %v324
    %v326 = vpop.f32.mrb[0].mxu0
    %327 = vmatprep.mubr.bf16.mxu0 0
    %328 = vmatmul.mubr.bf16.gmra.mrb[0].mxu0 %v165
    %v329 = vpop.f32.mrb[0].mxu0
    %v330 = vadd.f32 %v129, %v329
    %v331 = vpop.f32.mrb[0].mxu0
    %v332 = vpop.f32.mrb[0].mxu0
    %v333 = vadd.f32 %v129, %v332
    %v334 = vpop.f32.mrb[0].mxu0
    %335 = vmatprep.mubr.bf16.mxu0 0
    %336 = vmatmul.mubr.bf16.gmra.mrb[0].mxu0 %v168
    %v337 = vpop.f32.mrb[0].mxu0
    %v338 = vadd.f32 %v129, %v337
    %v339 = vpop.f32.mrb[0].mxu0
    %v340 = vpop.f32.mrb[0].mxu0
    %v341 = vadd.f32 %v129, %v340
    %v342 = vpop.f32.mrb[0].mxu0
    %343 = vmatprep.mubr.bf16.mxu0 0
    %344 = vmatmul.mubr.bf16.gmra.mrb[0].mxu0 %v171
    %v345 = vpop.f32.mrb[0].mxu0
    %v346 = vadd.f32 %v129, %v345
    %v347 = vpop.f32.mrb[0].mxu0
    %v348 = vpop.f32.mrb[0].mxu0
    %v349 = vadd.f32 %v129, %v348
    %v350 = vpop.f32.mrb[0].mxu0
    %351 = vmatprep.mubr.bf16.mxu0 0
    %352 = vmatmul.mubr.bf16.gmra.mrb[0].mxu0 %v174
    %v353 = vpop.f32.mrb[0].mxu0
    %v354 = vadd.f32 %v129, %v353
    %v355 = vpop.f32.mrb[0].mxu0
    %v356 = vpop.f32.mrb[0].mxu0
    %v357 = vadd.f32 %v129, %v356
    %v358 = vpop.f32.mrb[0].mxu0
    %359 = vmatprep.mubr.bf16.mxu0 0
    %360 = vmatmul.mubr.bf16.gmra.mrb[0].mxu0 %v177
    %v361 = vpop.f32.mrb[0].mxu0
    %v362 = vadd.f32 %v129, %v361
    %v363 = vpop.f32.mrb[0].mxu0
    %v364 = vpop.f32.mrb[0].mxu0
    %v365 = vadd.f32 %v129, %v364
    %v366 = vpop.f32.mrb[0].mxu0
    %367 = vmatprep.mubr.bf16.mxu0 0
    %368 = vmatmul.mubr.bf16.gmra.mrb[0].mxu0 %v180
    %v369 = vpop.f32.mrb[0].mxu0
    %v370 = vadd.f32 %v129, %v369
    %v371 = vpop.f32.mrb[0].mxu0
    %v372 = vpop.f32.mrb[0].mxu0
    %v373 = vadd.f32 %v129, %v372
    %v374 = vpop.f32.mrb[0].mxu0
    %375 = vmatprep.mubr.bf16.mxu0 0
    %376 = vmatmul.mubr.bf16.gmra.mrb[0].mxu0 %v183
    %v377 = vpop.f32.mrb[0].mxu0
    %v378 = vadd.f32 %v129, %v377
    %v379 = vpop.f32.mrb[0].mxu0
    %v380 = vpop.f32.mrb[0].mxu0
    %v381 = vadd.f32 %v129, %v380
    %v382 = vpop.f32.mrb[0].mxu0
    %383 = vmatprep.mubr.bf16.mxu0 0
    %384 = vmatmul.mubr.bf16.gmra.mrb[0].mxu0 %v186
    %v385 = vpop.f32.mrb[0].mxu0
    %v386 = vadd.f32 %v129, %v385
    %v387 = vpop.f32.mrb[0].mxu0
    %v388 = vpop.f32.mrb[0].mxu0
    %v389 = vadd.f32 %v129, %v388
    %v390 = vpop.f32.mrb[0].mxu0
    %391 = vmatprep.mubr.bf16.mxu0 0
    %392 = vmatmul.mubr.bf16.gmra.mrb[0].mxu0 %v189
    %v393 = vpop.f32.mrb[0].mxu0
    %v394 = vadd.f32 %v129, %v393
    %v395 = vpop.f32.mrb[0].mxu0
    %v396 = vpop.f32.mrb[0].mxu0
    %v397 = vadd.f32 %v129, %v396
    %v398 = vpop.f32.mrb[0].mxu0
    %399 = vmatprep.mubr.bf16.mxu0 0
    %400 = vmatmul.mubr.bf16.gmra.mrb[0].mxu0 %v192
    %v401 = vpop.f32.mrb[0].mxu0
    %v402 = vadd.f32 %v129, %v401
    %v403 = vpop.f32.mrb[0].mxu0
    %v404 = vpop.f32.mrb[0].mxu0
    %v405 = vadd.f32 %v129, %v404
    %v406 = vpop.f32.mrb[0].mxu0
    %407 = vmatprep.mubr.bf16.mxu0 0
    %408 = vmatmul.mubr.bf16.gmra.mrb[0].mxu0 %v195
    %v409 = vpop.f32.mrb[0].mxu0
    %v410 = vadd.f32 %v129, %v409
    %v411 = vpop.f32.mrb[0].mxu0
    %v412 = vpop.f32.mrb[0].mxu0
    %v413 = vadd.f32 %v129, %v412
    %v414 = vpop.f32.mrb[0].mxu0
    %415 = vmatprep.mubr.bf16.mxu0 0
    %416 = vmatmul.mubr.bf16.gmra.mrb[0].mxu0 %v198
    %v417 = vpop.f32.mrb[0].mxu0
    %v418 = vadd.f32 %v129, %v417
    %v419 = vpop.f32.mrb[0].mxu0
    %v420 = vpop.f32.mrb[0].mxu0
    %v421 = vadd.f32 %v129, %v420
    %v422 = vpop.f32.mrb[0].mxu0
    %423 = vmatprep.mubr.bf16.mxu0 0
    %424 = vmatmul.mubr.bf16.gmra.mrb[0].mxu0 %v201
    %v425 = vpop.f32.mrb[0].mxu0
    %v426 = vadd.f32 %v129, %v425
    %v427 = vpop.f32.mrb[0].mxu0
    %v428 = vpop.f32.mrb[0].mxu0
    %v429 = vadd.f32 %v129, %v428
    %v430 = vpop.f32.mrb[0].mxu0
    %431 = vmatprep.mubr.bf16.mxu0 0
    %432 = vmatmul.mubr.bf16.gmra.mrb[0].mxu0 %v204
    %v433 = vpop.f32.mrb[0].mxu0
    %v434 = vadd.f32 %v129, %v433
    %v435 = vpop.f32.mrb[0].mxu0
    %v436 = vpop.f32.mrb[0].mxu0
    %v437 = vadd.f32 %v129, %v436
    %v438 = vpop.f32.mrb[0].mxu0
    %439 = vmatprep.mubr.bf16.mxu0 0
    %440 = vmatmul.mubr.bf16.gmra.mrb[0].mxu0 %v207
    %v441 = vpop.f32.mrb[0].mxu0
    %v442 = vadd.f32 %v129, %v441
    %v443 = vpop.f32.mrb[0].mxu0
    %v444 = vpop.f32.mrb[0].mxu0
    %v445 = vadd.f32 %v129, %v444
    %v446 = vpop.f32.mrb[0].mxu0
    %447 = vmatprep.mubr.bf16.mxu0 0
    %448 = vmatmul.mubr.bf16.gmra.mrb[0].mxu0 %v210
    %v449 = vpop.f32.mrb[0].mxu0
    %v450 = vadd.f32 %v129, %v449
    %v451 = vpop.f32.mrb[0].mxu0
    %v452 = vpop.f32.mrb[0].mxu0
    %v453 = vadd.f32 %v129, %v452
    %v454 = vpop.f32.mrb[0].mxu0
    %455 = vmatprep.mubr.bf16.mxu0 0
    %456 = vmatmul.mubr.bf16.gmra.mrb[0].mxu0 %v213
    %v457 = vpop.f32.mrb[0].mxu0
    %v458 = vadd.f32 %v129, %v457
    %v459 = vpop.f32.mrb[0].mxu0
    %v460 = vpop.f32.mrb[0].mxu0
    %v461 = vadd.f32 %v129, %v460
    %v462 = vpop.f32.mrb[0].mxu0
    %463 = vmatprep.mubr.bf16.mxu0 0
    %464 = vmatmul.mubr.bf16.gmra.mrb[0].mxu0 %v216
    %v465 = vpop.f32.mrb[0].mxu0
    %v466 = vadd.f32 %v129, %v465
    %v467 = vpop.f32.mrb[0].mxu0
    %v468 = vpop.f32.mrb[0].mxu0
    %v469 = vadd.f32 %v129, %v468
    %v470 = vpop.f32.mrb[0].mxu0
    %471 = vmatprep.mubr.bf16.mxu0 0
    %472 = vmatmul.mubr.bf16.gmra.mrb[0].mxu0 %v219
    %v473 = vpop.f32.mrb[0].mxu0
    %v474 = vadd.f32 %v129, %v473
    %v475 = vpop.f32.mrb[0].mxu0
    %v476 = vpop.f32.mrb[0].mxu0
    %v477 = vadd.f32 %v129, %v476
    %v478 = vpop.f32.mrb[0].mxu0
    %479 = vmatprep.mubr.bf16.mxu0 0
    %480 = vmatmul.mubr.bf16.gmra.mrb[0].mxu0 %v222
    %v481 = vpop.f32.mrb[0].mxu0
    %v482 = vadd.f32 %v129, %v481
    %v483 = vpop.f32.mrb[0].mxu0
    %v484 = vpop.f32.mrb[0].mxu0
    %v485 = vadd.f32 %v129, %v484
    %v486 = vpop.f32.mrb[0].mxu0
    %487 = vmatprep.mubr.bf16.mxu0 0
    %488 = vmatmul.mubr.bf16.gmra.mrb[0].mxu0 %v225
    %v489 = vpop.f32.mrb[0].mxu0
    %v490 = vadd.f32 %v129, %v489
    %v491 = vpop.f32.mrb[0].mxu0
    %v492 = vpop.f32.mrb[0].mxu0
    %v493 = vadd.f32 %v129, %v492
    %v494 = vpop.f32.mrb[0].mxu0
    %495 = vmatprep.mubr.bf16.mxu0 0
    %496 = vmatmul.mubr.bf16.gmra.mrb[0].mxu0 %v228
    %v497 = vpop.f32.mrb[0].mxu0
    %v498 = vadd.f32 %v129, %v497
    %v499 = vpop.f32.mrb[0].mxu0
    %v500 = vpop.f32.mrb[0].mxu0
    %v501 = vadd.f32 %v129, %v500
    %v502 = vpop.f32.mrb[0].mxu0
    %503 = vmatprep.mubr.bf16.mxu0 0
    %504 = vmatmul.mubr.bf16.gmra.mrb[0].mxu0 %v231
    %v505 = vpop.f32.mrb[0].mxu0
    %v506 = vadd.f32 %v129, %v505
    %v507 = vpop.f32.mrb[0].mxu0
    %v508 = vpop.f32.mrb[0].mxu0
    %v509 = vadd.f32 %v129, %v508
    %v510 = vpop.f32.mrb[0].mxu0
    %511 = vmatprep.mubr.bf16.mxu0 0
    %512 = vmatmul.mubr.bf16.gmra.mrb[0].mxu0 %v234
    %v513 = vpop.f32.mrb[0].mxu0
    %v514 = vadd.f32 %v129, %v513
    %v515 = vpop.f32.mrb[0].mxu0
    %v516 = vpop.f32.mrb[0].mxu0
    %v517 = vadd.f32 %v129, %v516
    %v518 = vpop.f32.mrb[0].mxu0
    %519 = vmatprep.mubr.bf16.mxu0 0
    %520 = vmatmul.mubr.bf16.gmra.mrb[0].mxu0 %v237
    %v521 = vpop.f32.mrb[0].mxu0
    %v522 = vadd.f32 %v129, %v521
    %v523 = vpop.f32.mrb[0].mxu0
    %v524 = vpop.f32.mrb[0].mxu0
    %v525 = vadd.f32 %v129, %v524
    %v526 = vpop.f32.mrb[0].mxu0
    %527 = vdwg.mxu0
    %v528 = vmax.f32 %v274, 0.0
    %v529 = vmax.f32 %v277, 0.0
    %v530 = vmax.f32 %v282, 0.0
    %v531 = vmax.f32 %v285, 0.0
    %v532 = vmax.f32 %v290, 0.0
    %v533 = vmax.f32 %v293, 0.0
    %v534 = vmax.f32 %v298, 0.0
    %v535 = vmax.f32 %v301, 0.0
    %v536 = vmax.f32 %v306, 0.0
    %v537 = vmax.f32 %v309, 0.0
    %v538 = vmax.f32 %v314, 0.0
    %v539 = vmax.f32 %v317, 0.0
    %v540 = vmax.f32 %v322, 0.0
    %v541 = vmax.f32 %v325, 0.0
    %v542 = vmax.f32 %v330, 0.0
    %v543 = vmax.f32 %v333, 0.0
    %v544 = vmax.f32 %v338, 0.0
    %v545 = vmax.f32 %v341, 0.0
    %v546 = vmax.f32 %v346, 0.0
    %v547 = vmax.f32 %v349, 0.0
    %v548 = vmax.f32 %v354, 0.0
    %v549 = vmax.f32 %v357, 0.0
    %v550 = vmax.f32 %v362, 0.0
    %v551 = vmax.f32 %v365, 0.0
    %v552 = vmax.f32 %v370, 0.0
    %v553 = vmax.f32 %v373, 0.0
    %v554 = vmax.f32 %v378, 0.0
    %v555 = vmax.f32 %v381, 0.0
    %v556 = vmax.f32 %v386, 0.0
    %v557 = vmax.f32 %v389, 0.0
    %v558 = vmax.f32 %v394, 0.0
    %v559 = vmax.f32 %v397, 0.0
    %v560 = vmax.f32 %v402, 0.0
    %v561 = vmax.f32 %v405, 0.0
    %v562 = vmax.f32 %v410, 0.0
    %v563 = vmax.f32 %v413, 0.0
    %v564 = vmax.f32 %v418, 0.0
    %v565 = vmax.f32 %v421, 0.0
    %v566 = vmax.f32 %v426, 0.0
    %v567 = vmax.f32 %v429, 0.0
    %v568 = vmax.f32 %v434, 0.0
    %v569 = vmax.f32 %v437, 0.0
    %v570 = vmax.f32 %v442, 0.0
    %v571 = vmax.f32 %v445, 0.0
    %v572 = vmax.f32 %v450, 0.0
    %v573 = vmax.f32 %v453, 0.0
    %v574 = vmax.f32 %v458, 0.0
    %v575 = vmax.f32 %v461, 0.0
    %v576 = vmax.f32 %v466, 0.0
    %v577 = vmax.f32 %v469, 0.0
    %v578 = vmax.f32 %v474, 0.0
    %v579 = vmax.f32 %v477, 0.0
    %v580 = vmax.f32 %v482, 0.0
    %v581 = vmax.f32 %v485, 0.0
    %v582 = vmax.f32 %v490, 0.0
    %v583 = vmax.f32 %v493, 0.0
    %v584 = vmax.f32 %v498, 0.0
    %v585 = vmax.f32 %v501, 0.0
    %v586 = vmax.f32 %v506, 0.0
    %v587 = vmax.f32 %v509, 0.0
    %v588 = vmax.f32 %v514, 0.0
    %v589 = vmax.f32 %v517, 0.0
    %v590 = vmax.f32 %v522, 0.0
    %v591 = vmax.f32 %v525, 0.0
    %v592 = vpack.c.bf16 %v529, %v528
    %v593 = vpack.c.bf16 %v531, %v530
    %v594 = vpack.c.bf16 %v533, %v532
    %v595 = vpack.c.bf16 %v535, %v534
    %v596 = vpack.c.bf16 %v537, %v536
    %v597 = vpack.c.bf16 %v539, %v538
    %v598 = vpack.c.bf16 %v541, %v540
    %v599 = vpack.c.bf16 %v543, %v542
    %v600 = vpack.c.bf16 %v545, %v544
    %v601 = vpack.c.bf16 %v547, %v546
    %v602 = vpack.c.bf16 %v549, %v548
    %v603 = vpack.c.bf16 %v551, %v550
    %v604 = vpack.c.bf16 %v553, %v552
    %v605 = vpack.c.bf16 %v555, %v554
    %v606 = vpack.c.bf16 %v557, %v556
    %v607 = vpack.c.bf16 %v559, %v558
    %v608 = vpack.c.bf16 %v561, %v560
    %v609 = vpack.c.bf16 %v563, %v562
    %v610 = vpack.c.bf16 %v565, %v564
    %v611 = vpack.c.bf16 %v567, %v566
    %v612 = vpack.c.bf16 %v569, %v568
    %v613 = vpack.c.bf16 %v571, %v570
    %v614 = vpack.c.bf16 %v573, %v572
    %v615 = vpack.c.bf16 %v575, %v574
    %v616 = vpack.c.bf16 %v577, %v576
    %v617 = vpack.c.bf16 %v579, %v578
    %v618 = vpack.c.bf16 %v581, %v580
    %v619 = vpack.c.bf16 %v583, %v582
    %v620 = vpack.c.bf16 %v585, %v584
    %v621 = vpack.c.bf16 %v587, %v586
    %v622 = vpack.c.bf16 %v589, %v588
    %v623 = vpack.c.bf16 %v591, %v590
    %v624 = vld [vmem:[%s2] sm:$0xf]
    %v625 = vld [vmem:[%s2 + $0x4] sm:$0xf]
    %v626 = vld [vmem:[%s2 + $0x8] sm:$0xf]
    %v627 = vld [vmem:[%s2 + $0xc] sm:$0xf]
    %v628 = vld [vmem:[%s2 + $0x10] sm:$0xf]
    %v629 = vld [vmem:[%s2 + $0x14] sm:$0xf]
    %v630 = vld [vmem:[%s2 + $0x18] sm:$0xf]
    %v631 = vld [vmem:[%s2 + $0x1c] sm:$0xf]
    %v632 = vld [vmem:[%s2 + $0x20] sm:$0xf]
    %v633 = vld [vmem:[%s2 + $0x24] sm:$0xf]
    %v634 = vld [vmem:[%s2 + $0x28] sm:$0xf]
    %v635 = vld [vmem:[%s2 + $0x2c] sm:$0xf]
    %v636 = vld [vmem:[%s2 + $0x30] sm:$0xf]
    %v637 = vld [vmem:[%s2 + $0x34] sm:$0xf]
    %v638 = vld [vmem:[%s2 + $0x38] sm:$0xf]
    %v639 = vld [vmem:[%s2 + $0x3c] sm:$0xf]
    %v640 = vlaneseq
    %v641 = vshrl.u32 %v640, 7
    %v642 = vsub.s32 1, %v641
    %v643 = vrot.slane %v25, %v642
    %v660 = vunpack.c.l.b16 %v624
    %v661 = vunpack.c.l.b16 %v625
    %v662 = vunpack.c.l.b16 %v626
    %v663 = vunpack.c.l.b16 %v627
    %v664 = vunpack.c.l.b16 %v628
    %v665 = vunpack.c.l.b16 %v629
    %v666 = vunpack.c.l.b16 %v630
    %v667 = vunpack.c.l.b16 %v631
    %v668 = vunpack.c.l.b16 %v632
    %v669 = vunpack.c.l.b16 %v633
    %v670 = vunpack.c.l.b16 %v634
    %v671 = vunpack.c.l.b16 %v635
    %v672 = vunpack.c.l.b16 %v636
    %v673 = vunpack.c.l.b16 %v637
    %v674 = vunpack.c.l.b16 %v638
    %v675 = vunpack.c.l.b16 %v639
    %v676 = vpack.c.b16 %v661, %v660
    %v677 = vpack.c.b16 %v663, %v662
    %v678 = vpack.c.b16 %v665, %v664
    %v679 = vpack.c.b16 %v667, %v666
    %v680 = vpack.c.b16 %v669, %v668
    %v681 = vpack.c.b16 %v671, %v670
    %v682 = vpack.c.b16 %v673, %v672
    %v683 = vpack.c.b16 %v675, %v674
    %692 = vmatprep.subr.bf16.mxu0 0
    %693 = vmatpush1.bf16.msra.mxu0 %v676
    %694 = vmatprep.subr.bf16.mxu0 0
    %695 = vmatpush1.bf16.msra.mxu0 %v677
    %696 = vmatprep.subr.bf16.mxu0 0
    %697 = vmatpush1.bf16.msra.mxu0 %v678
    %698 = vmatprep.subr.bf16.mxu0 0
    %699 = vmatpush1.bf16.msra.mxu0 %v679
    %700 = vmatprep.subr.bf16.mxu0 0
    %701 = vmatpush1.bf16.msra.mxu0 %v680
    %702 = vmatprep.subr.bf16.mxu0 0
    %703 = vmatpush1.bf16.msra.mxu0 %v681
    %704 = vmatprep.subr.bf16.mxu0 0
    %705 = vmatpush1.bf16.msra.mxu0 %v682
    %706 = vmatprep.subr.bf16.mxu0 0
    %707 = vmatpush1.bf16.msra.mxu0 %v683
    %708 = vmatprep.subr.bf16.mxu0 0
    %709 = vmatpush1.bf16.msra.mxu0 0
    %710 = vmatprep.subr.bf16.mxu0 0
    %711 = vmatpush1.bf16.msra.mxu0 0
    %712 = vmatprep.subr.bf16.mxu0 0
    %713 = vmatpush1.bf16.msra.mxu0 0
    %714 = vmatprep.subr.bf16.mxu0 0
    %715 = vmatpush1.bf16.msra.mxu0 0
    %716 = vmatprep.subr.bf16.mxu0 0
    %717 = vmatpush1.bf16.msra.mxu0 0
    %718 = vmatprep.subr.bf16.mxu0 0
    %719 = vmatpush1.bf16.msra.mxu0 0
    %720 = vmatprep.subr.bf16.mxu0 0
    %721 = vmatpush1.bf16.msra.mxu0 0
    %722 = vmatprep.subr.bf16.mxu0 0
    %723 = vmatpush1.bf16.msra.mxu0 0
    %724 = vmatprep.mubr.bf16.mxu0 0
    %725 = vmatmul.mubr.bf16.gmra.mrb[0].mxu0 %v592
    %v726 = vpop.f32.mrb[0].mxu0
    %v727 = vadd.f32 %v643, %v726
    %v728 = vpop.f32.mrb[0].mxu0
    %v729 = vpop.f32.mrb[0].mxu0
    %v730 = vadd.f32 %v643, %v729
    %v731 = vpop.f32.mrb[0].mxu0
    %732 = vmatprep.mubr.bf16.mxu0 0
    %733 = vmatmul.mubr.bf16.gmra.mrb[0].mxu0 %v593
    %v734 = vpop.f32.mrb[0].mxu0
    %v735 = vadd.f32 %v643, %v734
    %v736 = vpop.f32.mrb[0].mxu0
    %v737 = vpop.f32.mrb[0].mxu0
    %v738 = vadd.f32 %v643, %v737
    %v739 = vpop.f32.mrb[0].mxu0
    %740 = vmatprep.mubr.bf16.mxu0 0
    %741 = vmatmul.mubr.bf16.gmra.mrb[0].mxu0 %v594
    %v742 = vpop.f32.mrb[0].mxu0
    %v743 = vadd.f32 %v643, %v742
    %v744 = vpop.f32.mrb[0].mxu0
    %v745 = vpop.f32.mrb[0].mxu0
    %v746 = vadd.f32 %v643, %v745
    %v747 = vpop.f32.mrb[0].mxu0
    %748 = vmatprep.mubr.bf16.mxu0 0
    %749 = vmatmul.mubr.bf16.gmra.mrb[0].mxu0 %v595
    %v750 = vpop.f32.mrb[0].mxu0
    %v751 = vadd.f32 %v643, %v750
    %v752 = vpop.f32.mrb[0].mxu0
    %v753 = vpop.f32.mrb[0].mxu0
    %v754 = vadd.f32 %v643, %v753
    %v755 = vpop.f32.mrb[0].mxu0
    %756 = vmatprep.mubr.bf16.mxu0 0
    %757 = vmatmul.mubr.bf16.gmra.mrb[0].mxu0 %v596
    %v758 = vpop.f32.mrb[0].mxu0
    %v759 = vadd.f32 %v643, %v758
    %v760 = vpop.f32.mrb[0].mxu0
    %v761 = vpop.f32.mrb[0].mxu0
    %v762 = vadd.f32 %v643, %v761
    %v763 = vpop.f32.mrb[0].mxu0
    %764 = vmatprep.mubr.bf16.mxu0 0
    %765 = vmatmul.mubr.bf16.gmra.mrb[0].mxu0 %v597
    %v766 = vpop.f32.mrb[0].mxu0
    %v767 = vadd.f32 %v643, %v766
    %v768 = vpop.f32.mrb[0].mxu0
    %v769 = vpop.f32.mrb[0].mxu0
    %v770 = vadd.f32 %v643, %v769
    %v771 = vpop.f32.mrb[0].mxu0
    %772 = vmatprep.mubr.bf16.mxu0 0
    %773 = vmatmul.mubr.bf16.gmra.mrb[0].mxu0 %v598
    %v774 = vpop.f32.mrb[0].mxu0
    %v775 = vadd.f32 %v643, %v774
    %v776 = vpop.f32.mrb[0].mxu0
    %v777 = vpop.f32.mrb[0].mxu0
    %v778 = vadd.f32 %v643, %v777
    %v779 = vpop.f32.mrb[0].mxu0
    %780 = vmatprep.mubr.bf16.mxu0 0
    %781 = vmatmul.mubr.bf16.gmra.mrb[0].mxu0 %v599
    %v782 = vpop.f32.mrb[0].mxu0
    %v783 = vadd.f32 %v643, %v782
    %v784 = vpop.f32.mrb[0].mxu0
    %v785 = vpop.f32.mrb[0].mxu0
    %v786 = vadd.f32 %v643, %v785
    %v787 = vpop.f32.mrb[0].mxu0
    %788 = vmatprep.mubr.bf16.mxu0 0
    %789 = vmatmul.mubr.bf16.gmra.mrb[0].mxu0 %v600
    %v790 = vpop.f32.mrb[0].mxu0
    %v791 = vadd.f32 %v643, %v790
    %v792 = vpop.f32.mrb[0].mxu0
    %v793 = vpop.f32.mrb[0].mxu0
    %v794 = vadd.f32 %v643, %v793
    %v795 = vpop.f32.mrb[0].mxu0
    %796 = vmatprep.mubr.bf16.mxu0 0
    %797 = vmatmul.mubr.bf16.gmra.mrb[0].mxu0 %v601
    %v798 = vpop.f32.mrb[0].mxu0
    %v799 = vadd.f32 %v643, %v798
    %v800 = vpop.f32.mrb[0].mxu0
    %v801 = vpop.f32.mrb[0].mxu0
    %v802 = vadd.f32 %v643, %v801
    %v803 = vpop.f32.mrb[0].mxu0
    %804 = vmatprep.mubr.bf16.mxu0 0
    %805 = vmatmul.mubr.bf16.gmra.mrb[0].mxu0 %v602
    %v806 = vpop.f32.mrb[0].mxu0
    %v807 = vadd.f32 %v643, %v806
    %v808 = vpop.f32.mrb[0].mxu0
    %v809 = vpop.f32.mrb[0].mxu0
    %v810 = vadd.f32 %v643, %v809
    %v811 = vpop.f32.mrb[0].mxu0
    %812 = vmatprep.mubr.bf16.mxu0 0
    %813 = vmatmul.mubr.bf16.gmra.mrb[0].mxu0 %v603
    %v814 = vpop.f32.mrb[0].mxu0
    %v815 = vadd.f32 %v643, %v814
    %v816 = vpop.f32.mrb[0].mxu0
    %v817 = vpop.f32.mrb[0].mxu0
    %v818 = vadd.f32 %v643, %v817
    %v819 = vpop.f32.mrb[0].mxu0
    %820 = vmatprep.mubr.bf16.mxu0 0
    %821 = vmatmul.mubr.bf16.gmra.mrb[0].mxu0 %v604
    %v822 = vpop.f32.mrb[0].mxu0
    %v823 = vadd.f32 %v643, %v822
    %v824 = vpop.f32.mrb[0].mxu0
    %v825 = vpop.f32.mrb[0].mxu0
    %v826 = vadd.f32 %v643, %v825
    %v827 = vpop.f32.mrb[0].mxu0
    %828 = vmatprep.mubr.bf16.mxu0 0
    %829 = vmatmul.mubr.bf16.gmra.mrb[0].mxu0 %v605
    %v830 = vpop.f32.mrb[0].mxu0
    %v831 = vadd.f32 %v643, %v830
    %v832 = vpop.f32.mrb[0].mxu0
    %v833 = vpop.f32.mrb[0].mxu0
    %v834 = vadd.f32 %v643, %v833
    %v835 = vpop.f32.mrb[0].mxu0
    %836 = vmatprep.mubr.bf16.mxu0 0
    %837 = vmatmul.mubr.bf16.gmra.mrb[0].mxu0 %v606
    %v838 = vpop.f32.mrb[0].mxu0
    %v839 = vadd.f32 %v643, %v838
    %v840 = vpop.f32.mrb[0].mxu0
    %v841 = vpop.f32.mrb[0].mxu0
    %v842 = vadd.f32 %v643, %v841
    %v843 = vpop.f32.mrb[0].mxu0
    %844 = vmatprep.mubr.bf16.mxu0 0
    %845 = vmatmul.mubr.bf16.gmra.mrb[0].mxu0 %v607
    %v846 = vpop.f32.mrb[0].mxu0
    %v847 = vadd.f32 %v643, %v846
    %v848 = vpop.f32.mrb[0].mxu0
    %v849 = vpop.f32.mrb[0].mxu0
    %v850 = vadd.f32 %v643, %v849
    %v851 = vpop.f32.mrb[0].mxu0
    %852 = vmatprep.mubr.bf16.mxu0 0
    %853 = vmatmul.mubr.bf16.gmra.mrb[0].mxu0 %v608
    %v854 = vpop.f32.mrb[0].mxu0
    %v855 = vadd.f32 %v643, %v854
    %v856 = vpop.f32.mrb[0].mxu0
    %v857 = vpop.f32.mrb[0].mxu0
    %v858 = vadd.f32 %v643, %v857
    %v859 = vpop.f32.mrb[0].mxu0
    %860 = vmatprep.mubr.bf16.mxu0 0
    %861 = vmatmul.mubr.bf16.gmra.mrb[0].mxu0 %v609
    %v862 = vpop.f32.mrb[0].mxu0
    %v863 = vadd.f32 %v643, %v862
    %v864 = vpop.f32.mrb[0].mxu0
    %v865 = vpop.f32.mrb[0].mxu0
    %v866 = vadd.f32 %v643, %v865
    %v867 = vpop.f32.mrb[0].mxu0
    %868 = vmatprep.mubr.bf16.mxu0 0
    %869 = vmatmul.mubr.bf16.gmra.mrb[0].mxu0 %v610
    %v870 = vpop.f32.mrb[0].mxu0
    %v871 = vadd.f32 %v643, %v870
    %v872 = vpop.f32.mrb[0].mxu0
    %v873 = vpop.f32.mrb[0].mxu0
    %v874 = vadd.f32 %v643, %v873
    %v875 = vpop.f32.mrb[0].mxu0
    %876 = vmatprep.mubr.bf16.mxu0 0
    %877 = vmatmul.mubr.bf16.gmra.mrb[0].mxu0 %v611
    %v878 = vpop.f32.mrb[0].mxu0
    %v879 = vadd.f32 %v643, %v878
    %v880 = vpop.f32.mrb[0].mxu0
    %v881 = vpop.f32.mrb[0].mxu0
    %v882 = vadd.f32 %v643, %v881
    %v883 = vpop.f32.mrb[0].mxu0
    %884 = vmatprep.mubr.bf16.mxu0 0
    %885 = vmatmul.mubr.bf16.gmra.mrb[0].mxu0 %v612
    %v886 = vpop.f32.mrb[0].mxu0
    %v887 = vadd.f32 %v643, %v886
    %v888 = vpop.f32.mrb[0].mxu0
    %v889 = vpop.f32.mrb[0].mxu0
    %v890 = vadd.f32 %v643, %v889
    %v891 = vpop.f32.mrb[0].mxu0
    %892 = vmatprep.mubr.bf16.mxu0 0
    %893 = vmatmul.mubr.bf16.gmra.mrb[0].mxu0 %v613
    %v894 = vpop.f32.mrb[0].mxu0
    %v895 = vadd.f32 %v643, %v894
    %v896 = vpop.f32.mrb[0].mxu0
    %v897 = vpop.f32.mrb[0].mxu0
    %v898 = vadd.f32 %v643, %v897
    %v899 = vpop.f32.mrb[0].mxu0
    %900 = vmatprep.mubr.bf16.mxu0 0
    %901 = vmatmul.mubr.bf16.gmra.mrb[0].mxu0 %v614
    %v902 = vpop.f32.mrb[0].mxu0
    %v903 = vadd.f32 %v643, %v902
    %v904 = vpop.f32.mrb[0].mxu0
    %v905 = vpop.f32.mrb[0].mxu0
    %v906 = vadd.f32 %v643, %v905
    %v907 = vpop.f32.mrb[0].mxu0
    %908 = vmatprep.mubr.bf16.mxu0 0
    %909 = vmatmul.mubr.bf16.gmra.mrb[0].mxu0 %v615
    %v910 = vpop.f32.mrb[0].mxu0
    %v911 = vadd.f32 %v643, %v910
    %v912 = vpop.f32.mrb[0].mxu0
    %v913 = vpop.f32.mrb[0].mxu0
    %v914 = vadd.f32 %v643, %v913
    %v915 = vpop.f32.mrb[0].mxu0
    %916 = vmatprep.mubr.bf16.mxu0 0
    %917 = vmatmul.mubr.bf16.gmra.mrb[0].mxu0 %v616
    %v918 = vpop.f32.mrb[0].mxu0
    %v919 = vadd.f32 %v643, %v918
    %v920 = vpop.f32.mrb[0].mxu0
    %v921 = vpop.f32.mrb[0].mxu0
    %v922 = vadd.f32 %v643, %v921
    %v923 = vpop.f32.mrb[0].mxu0
    %924 = vmatprep.mubr.bf16.mxu0 0
    %925 = vmatmul.mubr.bf16.gmra.mrb[0].mxu0 %v617
    %v926 = vpop.f32.mrb[0].mxu0
    %v927 = vadd.f32 %v643, %v926
    %v928 = vpop.f32.mrb[0].mxu0
    %v929 = vpop.f32.mrb[0].mxu0
    %v930 = vadd.f32 %v643, %v929
    %v931 = vpop.f32.mrb[0].mxu0
    %932 = vmatprep.mubr.bf16.mxu0 0
    %933 = vmatmul.mubr.bf16.gmra.mrb[0].mxu0 %v618
    %v934 = vpop.f32.mrb[0].mxu0
    %v935 = vadd.f32 %v643, %v934
    %v936 = vpop.f32.mrb[0].mxu0
    %v937 = vpop.f32.mrb[0].mxu0
    %v938 = vadd.f32 %v643, %v937
    %v939 = vpop.f32.mrb[0].mxu0
    %940 = vmatprep.mubr.bf16.mxu0 0
    %941 = vmatmul.mubr.bf16.gmra.mrb[0].mxu0 %v619
    %v942 = vpop.f32.mrb[0].mxu0
    %v943 = vadd.f32 %v643, %v942
    %v944 = vpop.f32.mrb[0].mxu0
    %v945 = vpop.f32.mrb[0].mxu0
    %v946 = vadd.f32 %v643, %v945
    %v947 = vpop.f32.mrb[0].mxu0
    %948 = vmatprep.mubr.bf16.mxu0 0
    %949 = vmatmul.mubr.bf16.gmra.mrb[0].mxu0 %v620
    %v950 = vpop.f32.mrb[0].mxu0
    %v951 = vadd.f32 %v643, %v950
    %v952 = vpop.f32.mrb[0].mxu0
    %v953 = vpop.f32.mrb[0].mxu0
    %v954 = vadd.f32 %v643, %v953
    %v955 = vpop.f32.mrb[0].mxu0
    %956 = vmatprep.mubr.bf16.mxu0 0
    %957 = vmatmul.mubr.bf16.gmra.mrb[0].mxu0 %v621
    %v958 = vpop.f32.mrb[0].mxu0
    %v959 = vadd.f32 %v643, %v958
    %v960 = vpop.f32.mrb[0].mxu0
    %v961 = vpop.f32.mrb[0].mxu0
    %v962 = vadd.f32 %v643, %v961
    %v963 = vpop.f32.mrb[0].mxu0
    %964 = vmatprep.mubr.bf16.mxu0 0
    %965 = vmatmul.mubr.bf16.gmra.mrb[0].mxu0 %v622
    %v966 = vpop.f32.mrb[0].mxu0
    %v967 = vadd.f32 %v643, %v966
    %v968 = vpop.f32.mrb[0].mxu0
    %v969 = vpop.f32.mrb[0].mxu0
    %v970 = vadd.f32 %v643, %v969
    %v971 = vpop.f32.mrb[0].mxu0
    %972 = vmatprep.mubr.bf16.mxu0 0
    %973 = vmatmul.mubr.bf16.gmra.mrb[0].mxu0 %v623
    %v974 = vpop.f32.mrb[0].mxu0
    %v975 = vadd.f32 %v643, %v974
    %v976 = vpop.f32.mrb[0].mxu0
    %v977 = vpop.f32.mrb[0].mxu0
    %v978 = vadd.f32 %v643, %v977
    %v979 = vpop.f32.mrb[0].mxu0
    %980 = vdwg.mxu0
    %v981 = vmax.f32 %v727, 0.0
    %v982 = vmax.f32 %v730, 0.0
    %v983 = vmax.f32 %v735, 0.0
    %v984 = vmax.f32 %v738, 0.0
    %v985 = vmax.f32 %v743, 0.0
    %v986 = vmax.f32 %v746, 0.0
    %v987 = vmax.f32 %v751, 0.0
    %v988 = vmax.f32 %v754, 0.0
    %v989 = vmax.f32 %v759, 0.0
    %v990 = vmax.f32 %v762, 0.0
    %v991 = vmax.f32 %v767, 0.0
    %v992 = vmax.f32 %v770, 0.0
    %v993 = vmax.f32 %v775, 0.0
    %v994 = vmax.f32 %v778, 0.0
    %v995 = vmax.f32 %v783, 0.0
    %v996 = vmax.f32 %v786, 0.0
    %v997 = vmax.f32 %v791, 0.0
    %v998 = vmax.f32 %v794, 0.0
    %v999 = vmax.f32 %v799, 0.0
    %v1000 = vmax.f32 %v802, 0.0
    %v1001 = vmax.f32 %v807, 0.0
    %v1002 = vmax.f32 %v810, 0.0
    %v1003 = vmax.f32 %v815, 0.0
    %v1004 = vmax.f32 %v818, 0.0
    %v1005 = vmax.f32 %v823, 0.0
    %v1006 = vmax.f32 %v826, 0.0
    %v1007 = vmax.f32 %v831, 0.0
    %v1008 = vmax.f32 %v834, 0.0
    %v1009 = vmax.f32 %v839, 0.0
    %v1010 = vmax.f32 %v842, 0.0
    %v1011 = vmax.f32 %v847, 0.0
    %v1012 = vmax.f32 %v850, 0.0
    %v1013 = vmax.f32 %v855, 0.0
    %v1014 = vmax.f32 %v858, 0.0
    %v1015 = vmax.f32 %v863, 0.0
    %v1016 = vmax.f32 %v866, 0.0
    %v1017 = vmax.f32 %v871, 0.0
    %v1018 = vmax.f32 %v874, 0.0
    %v1019 = vmax.f32 %v879, 0.0
    %v1020 = vmax.f32 %v882, 0.0
    %v1021 = vmax.f32 %v887, 0.0
    %v1022 = vmax.f32 %v890, 0.0
    %v1023 = vmax.f32 %v895, 0.0
    %v1024 = vmax.f32 %v898, 0.0
    %v1025 = vmax.f32 %v903, 0.0
    %v1026 = vmax.f32 %v906, 0.0
    %v1027 = vmax.f32 %v911, 0.0
    %v1028 = vmax.f32 %v914, 0.0
    %v1029 = vmax.f32 %v919, 0.0
    %v1030 = vmax.f32 %v922, 0.0
    %v1031 = vmax.f32 %v927, 0.0
    %v1032 = vmax.f32 %v930, 0.0
    %v1033 = vmax.f32 %v935, 0.0
    %v1034 = vmax.f32 %v938, 0.0
    %v1035 = vmax.f32 %v943, 0.0
    %v1036 = vmax.f32 %v946, 0.0
    %v1037 = vmax.f32 %v951, 0.0
    %v1038 = vmax.f32 %v954, 0.0
    %v1039 = vmax.f32 %v959, 0.0
    %v1040 = vmax.f32 %v962, 0.0
    %v1041 = vmax.f32 %v967, 0.0
    %v1042 = vmax.f32 %v970, 0.0
    %v1043 = vmax.f32 %v975, 0.0
    %v1044 = vmax.f32 %v978, 0.0
    %v1045 = vpack.c.bf16 %v982, %v981
    %v1046 = vpack.c.bf16 %v984, %v983
    %v1047 = vpack.c.bf16 %v986, %v985
    %v1048 = vpack.c.bf16 %v988, %v987
    %v1049 = vpack.c.bf16 %v990, %v989
    %v1050 = vpack.c.bf16 %v992, %v991
    %v1051 = vpack.c.bf16 %v994, %v993
    %v1052 = vpack.c.bf16 %v996, %v995
    %v1053 = vpack.c.bf16 %v998, %v997
    %v1054 = vpack.c.bf16 %v1000, %v999
    %v1055 = vpack.c.bf16 %v1002, %v1001
    %v1056 = vpack.c.bf16 %v1004, %v1003
    %v1057 = vpack.c.bf16 %v1006, %v1005
    %v1058 = vpack.c.bf16 %v1008, %v1007
    %v1059 = vpack.c.bf16 %v1010, %v1009
    %v1060 = vpack.c.bf16 %v1012, %v1011
    %v1061 = vpack.c.bf16 %v1014, %v1013
    %v1062 = vpack.c.bf16 %v1016, %v1015
    %v1063 = vpack.c.bf16 %v1018, %v1017
    %v1064 = vpack.c.bf16 %v1020, %v1019
    %v1065 = vpack.c.bf16 %v1022, %v1021
    %v1066 = vpack.c.bf16 %v1024, %v1023
    %v1067 = vpack.c.bf16 %v1026, %v1025
    %v1068 = vpack.c.bf16 %v1028, %v1027
    %v1069 = vpack.c.bf16 %v1030, %v1029
    %v1070 = vpack.c.bf16 %v1032, %v1031
    %v1071 = vpack.c.bf16 %v1034, %v1033
    %v1072 = vpack.c.bf16 %v1036, %v1035
    %v1073 = vpack.c.bf16 %v1038, %v1037
    %v1074 = vpack.c.bf16 %v1040, %v1039
    %v1075 = vpack.c.bf16 %v1042, %v1041
    %v1076 = vpack.c.bf16 %v1044, %v1043
    %v1077 = vld [vmem:[%s3] sm:$0xf]
    %v1078 = vld [vmem:[%s3 + $0x4] sm:$0xf]
    %v1079 = vld [vmem:[%s3 + $0x8] sm:$0xf]
    %v1080 = vld [vmem:[%s3 + $0xc] sm:$0xf]
    %v1081 = vld [vmem:[%s3 + $0x10] sm:$0xf]
    %v1082 = vld [vmem:[%s3 + $0x14] sm:$0xf]
    %v1083 = vld [vmem:[%s3 + $0x18] sm:$0xf]
    %v1084 = vld [vmem:[%s3 + $0x1c] sm:$0xf]
    %v1085 = vlaneseq
    %v1086 = vshrl.u32 %v1085, 7
    %v1087 = vsub.s32 2, %v1086
    %v1088 = vrot.slane %v25, %v1087
    %v1097 = vunpack.c.l.b16 %v1077
    %v1098 = vunpack.c.l.b16 %v1078
    %v1099 = vunpack.c.l.b16 %v1079
    %v1100 = vunpack.c.l.b16 %v1080
    %v1101 = vunpack.c.l.b16 %v1081
    %v1102 = vunpack.c.l.b16 %v1082
    %v1103 = vunpack.c.l.b16 %v1083
    %v1104 = vunpack.c.l.b16 %v1084
    %v1105 = vpack.c.b16 %v1098, %v1097
    %v1106 = vpack.c.b16 %v1100, %v1099
    %v1107 = vpack.c.b16 %v1102, %v1101
    %v1108 = vpack.c.b16 %v1104, %v1103
    %vm1113 = vcmask 523264
    %v1115 = vsel %vm1113, %v1045, 0
    %v1118 = vsel %vm1113, %v1046, 0
    %v1121 = vsel %vm1113, %v1047, 0
    %v1124 = vsel %vm1113, %v1048, 0
    %v1127 = vsel %vm1113, %v1049, 0
    %v1130 = vsel %vm1113, %v1050, 0
    %v1133 = vsel %vm1113, %v1051, 0
    %v1136 = vsel %vm1113, %v1052, 0
    %v1139 = vsel %vm1113, %v1053, 0
    %v1142 = vsel %vm1113, %v1054, 0
    %v1145 = vsel %vm1113, %v1055, 0
    %v1148 = vsel %vm1113, %v1056, 0
    %v1151 = vsel %vm1113, %v1057, 0
    %v1154 = vsel %vm1113, %v1058, 0
    %v1157 = vsel %vm1113, %v1059, 0
    %v1160 = vsel %vm1113, %v1060, 0
    %v1163 = vsel %vm1113, %v1061, 0
    %v1166 = vsel %vm1113, %v1062, 0
    %v1169 = vsel %vm1113, %v1063, 0
    %v1172 = vsel %vm1113, %v1064, 0
    %v1175 = vsel %vm1113, %v1065, 0
    %v1178 = vsel %vm1113, %v1066, 0
    %v1181 = vsel %vm1113, %v1067, 0
    %v1184 = vsel %vm1113, %v1068, 0
    %v1187 = vsel %vm1113, %v1069, 0
    %v1190 = vsel %vm1113, %v1070, 0
    %v1193 = vsel %vm1113, %v1071, 0
    %v1196 = vsel %vm1113, %v1072, 0
    %v1199 = vsel %vm1113, %v1073, 0
    %v1202 = vsel %vm1113, %v1074, 0
    %v1205 = vsel %vm1113, %v1075, 0
    %v1208 = vsel %vm1113, %v1076, 0
    %1210 = vmatprep.subr.bf16.mxu0 0
    %1211 = vmatpush1.bf16.msra.mxu0 %v1105
    %1212 = vmatprep.subr.bf16.mxu0 0
    %1213 = vmatpush1.bf16.msra.mxu0 %v1106
    %1214 = vmatprep.subr.bf16.mxu0 0
    %1215 = vmatpush1.bf16.msra.mxu0 %v1107
    %1216 = vmatprep.subr.bf16.mxu0 0
    %1217 = vmatpush1.bf16.msra.mxu0 %v1108
    %1218 = vmatprep.subr.bf16.mxu0 0
    %1219 = vmatpush1.bf16.msra.mxu0 0
    %1220 = vmatprep.subr.bf16.mxu0 0
    %1221 = vmatpush1.bf16.msra.mxu0 0
    %1222 = vmatprep.subr.bf16.mxu0 0
    %1223 = vmatpush1.bf16.msra.mxu0 0
    %1224 = vmatprep.subr.bf16.mxu0 0
    %1225 = vmatpush1.bf16.msra.mxu0 0
    %1226 = vmatprep.subr.bf16.mxu0 0
    %1227 = vmatpush1.bf16.msra.mxu0 0
    %1228 = vmatprep.subr.bf16.mxu0 0
    %1229 = vmatpush1.bf16.msra.mxu0 0
    %1230 = vmatprep.subr.bf16.mxu0 0
    %1231 = vmatpush1.bf16.msra.mxu0 0
    %1232 = vmatprep.subr.bf16.mxu0 0
    %1233 = vmatpush1.bf16.msra.mxu0 0
    %1234 = vmatprep.subr.bf16.mxu0 0
    %1235 = vmatpush1.bf16.msra.mxu0 0
    %1236 = vmatprep.subr.bf16.mxu0 0
    %1237 = vmatpush1.bf16.msra.mxu0 0
    %1238 = vmatprep.subr.bf16.mxu0 0
    %1239 = vmatpush1.bf16.msra.mxu0 0
    %1240 = vmatprep.subr.bf16.mxu0 0
    %1241 = vmatpush1.bf16.msra.mxu0 0
    %1242 = vmatprep.mubr.bf16.mxu0 0
    %1243 = vmatmul.mubr.bf16.gmra.mrb[0].mxu0 %v1115
    %v1244 = vpop.f32.mrb[0].mxu0
    %v1245 = vadd.f32 %v1088, %v1244
    %v1246 = vpop.f32.mrb[0].mxu0
    %v1247 = vpop.f32.mrb[0].mxu0
    %v1248 = vadd.f32 %v1088, %v1247
    %v1249 = vpop.f32.mrb[0].mxu0
    %1250 = vmatprep.mubr.bf16.mxu0 0
    %1251 = vmatmul.mubr.bf16.gmra.mrb[0].mxu0 %v1118
    %v1252 = vpop.f32.mrb[0].mxu0
    %v1253 = vadd.f32 %v1088, %v1252
    %v1254 = vpop.f32.mrb[0].mxu0
    %v1255 = vpop.f32.mrb[0].mxu0
    %v1256 = vadd.f32 %v1088, %v1255
    %v1257 = vpop.f32.mrb[0].mxu0
    %1258 = vmatprep.mubr.bf16.mxu0 0
    %1259 = vmatmul.mubr.bf16.gmra.mrb[0].mxu0 %v1121
    %v1260 = vpop.f32.mrb[0].mxu0
    %v1261 = vadd.f32 %v1088, %v1260
    %v1262 = vpop.f32.mrb[0].mxu0
    %v1263 = vpop.f32.mrb[0].mxu0
    %v1264 = vadd.f32 %v1088, %v1263
    %v1265 = vpop.f32.mrb[0].mxu0
    %1266 = vmatprep.mubr.bf16.mxu0 0
    %1267 = vmatmul.mubr.bf16.gmra.mrb[0].mxu0 %v1124
    %v1268 = vpop.f32.mrb[0].mxu0
    %v1269 = vadd.f32 %v1088, %v1268
    %v1270 = vpop.f32.mrb[0].mxu0
    %v1271 = vpop.f32.mrb[0].mxu0
    %v1272 = vadd.f32 %v1088, %v1271
    %v1273 = vpop.f32.mrb[0].mxu0
    %1274 = vmatprep.mubr.bf16.mxu0 0
    %1275 = vmatmul.mubr.bf16.gmra.mrb[0].mxu0 %v1127
    %v1276 = vpop.f32.mrb[0].mxu0
    %v1277 = vadd.f32 %v1088, %v1276
    %v1278 = vpop.f32.mrb[0].mxu0
    %v1279 = vpop.f32.mrb[0].mxu0
    %v1280 = vadd.f32 %v1088, %v1279
    %v1281 = vpop.f32.mrb[0].mxu0
    %1282 = vmatprep.mubr.bf16.mxu0 0
    %1283 = vmatmul.mubr.bf16.gmra.mrb[0].mxu0 %v1130
    %v1284 = vpop.f32.mrb[0].mxu0
    %v1285 = vadd.f32 %v1088, %v1284
    %v1286 = vpop.f32.mrb[0].mxu0
    %v1287 = vpop.f32.mrb[0].mxu0
    %v1288 = vadd.f32 %v1088, %v1287
    %v1289 = vpop.f32.mrb[0].mxu0
    %1290 = vmatprep.mubr.bf16.mxu0 0
    %1291 = vmatmul.mubr.bf16.gmra.mrb[0].mxu0 %v1133
    %v1292 = vpop.f32.mrb[0].mxu0
    %v1293 = vadd.f32 %v1088, %v1292
    %v1294 = vpop.f32.mrb[0].mxu0
    %v1295 = vpop.f32.mrb[0].mxu0
    %v1296 = vadd.f32 %v1088, %v1295
    %v1297 = vpop.f32.mrb[0].mxu0
    %1298 = vmatprep.mubr.bf16.mxu0 0
    %1299 = vmatmul.mubr.bf16.gmra.mrb[0].mxu0 %v1136
    %v1300 = vpop.f32.mrb[0].mxu0
    %v1301 = vadd.f32 %v1088, %v1300
    %v1302 = vpop.f32.mrb[0].mxu0
    %v1303 = vpop.f32.mrb[0].mxu0
    %v1304 = vadd.f32 %v1088, %v1303
    %v1305 = vpop.f32.mrb[0].mxu0
    %1306 = vmatprep.mubr.bf16.mxu0 0
    %1307 = vmatmul.mubr.bf16.gmra.mrb[0].mxu0 %v1139
    %v1308 = vpop.f32.mrb[0].mxu0
    %v1309 = vadd.f32 %v1088, %v1308
    %v1310 = vpop.f32.mrb[0].mxu0
    %v1311 = vpop.f32.mrb[0].mxu0
    %v1312 = vadd.f32 %v1088, %v1311
    %v1313 = vpop.f32.mrb[0].mxu0
    %1314 = vmatprep.mubr.bf16.mxu0 0
    %1315 = vmatmul.mubr.bf16.gmra.mrb[0].mxu0 %v1142
    %v1316 = vpop.f32.mrb[0].mxu0
    %v1317 = vadd.f32 %v1088, %v1316
    %v1318 = vpop.f32.mrb[0].mxu0
    %v1319 = vpop.f32.mrb[0].mxu0
    %v1320 = vadd.f32 %v1088, %v1319
    %v1321 = vpop.f32.mrb[0].mxu0
    %1322 = vmatprep.mubr.bf16.mxu0 0
    %1323 = vmatmul.mubr.bf16.gmra.mrb[0].mxu0 %v1145
    %v1324 = vpop.f32.mrb[0].mxu0
    %v1325 = vadd.f32 %v1088, %v1324
    %v1326 = vpop.f32.mrb[0].mxu0
    %v1327 = vpop.f32.mrb[0].mxu0
    %v1328 = vadd.f32 %v1088, %v1327
    %v1329 = vpop.f32.mrb[0].mxu0
    %1330 = vmatprep.mubr.bf16.mxu0 0
    %1331 = vmatmul.mubr.bf16.gmra.mrb[0].mxu0 %v1148
    %v1332 = vpop.f32.mrb[0].mxu0
    %v1333 = vadd.f32 %v1088, %v1332
    %v1334 = vpop.f32.mrb[0].mxu0
    %v1335 = vpop.f32.mrb[0].mxu0
    %v1336 = vadd.f32 %v1088, %v1335
    %v1337 = vpop.f32.mrb[0].mxu0
    %1338 = vmatprep.mubr.bf16.mxu0 0
    %1339 = vmatmul.mubr.bf16.gmra.mrb[0].mxu0 %v1151
    %v1340 = vpop.f32.mrb[0].mxu0
    %v1341 = vadd.f32 %v1088, %v1340
    %v1342 = vpop.f32.mrb[0].mxu0
    %v1343 = vpop.f32.mrb[0].mxu0
    %v1344 = vadd.f32 %v1088, %v1343
    %v1345 = vpop.f32.mrb[0].mxu0
    %1346 = vmatprep.mubr.bf16.mxu0 0
    %1347 = vmatmul.mubr.bf16.gmra.mrb[0].mxu0 %v1154
    %v1348 = vpop.f32.mrb[0].mxu0
    %v1349 = vadd.f32 %v1088, %v1348
    %v1350 = vpop.f32.mrb[0].mxu0
    %v1351 = vpop.f32.mrb[0].mxu0
    %v1352 = vadd.f32 %v1088, %v1351
    %v1353 = vpop.f32.mrb[0].mxu0
    %1354 = vmatprep.mubr.bf16.mxu0 0
    %1355 = vmatmul.mubr.bf16.gmra.mrb[0].mxu0 %v1157
    %v1356 = vpop.f32.mrb[0].mxu0
    %v1357 = vadd.f32 %v1088, %v1356
    %v1358 = vpop.f32.mrb[0].mxu0
    %v1359 = vpop.f32.mrb[0].mxu0
    %v1360 = vadd.f32 %v1088, %v1359
    %v1361 = vpop.f32.mrb[0].mxu0
    %1362 = vmatprep.mubr.bf16.mxu0 0
    %1363 = vmatmul.mubr.bf16.gmra.mrb[0].mxu0 %v1160
    %v1364 = vpop.f32.mrb[0].mxu0
    %v1365 = vadd.f32 %v1088, %v1364
    %v1366 = vpop.f32.mrb[0].mxu0
    %v1367 = vpop.f32.mrb[0].mxu0
    %v1368 = vadd.f32 %v1088, %v1367
    %v1369 = vpop.f32.mrb[0].mxu0
    %1370 = vmatprep.mubr.bf16.mxu0 0
    %1371 = vmatmul.mubr.bf16.gmra.mrb[0].mxu0 %v1163
    %v1372 = vpop.f32.mrb[0].mxu0
    %v1373 = vadd.f32 %v1088, %v1372
    %v1374 = vpop.f32.mrb[0].mxu0
    %v1375 = vpop.f32.mrb[0].mxu0
    %v1376 = vadd.f32 %v1088, %v1375
    %v1377 = vpop.f32.mrb[0].mxu0
    %1378 = vmatprep.mubr.bf16.mxu0 0
    %1379 = vmatmul.mubr.bf16.gmra.mrb[0].mxu0 %v1166
    %v1380 = vpop.f32.mrb[0].mxu0
    %v1381 = vadd.f32 %v1088, %v1380
    %v1382 = vpop.f32.mrb[0].mxu0
    %v1383 = vpop.f32.mrb[0].mxu0
    %v1384 = vadd.f32 %v1088, %v1383
    %v1385 = vpop.f32.mrb[0].mxu0
    %1386 = vmatprep.mubr.bf16.mxu0 0
    %1387 = vmatmul.mubr.bf16.gmra.mrb[0].mxu0 %v1169
    %v1388 = vpop.f32.mrb[0].mxu0
    %v1389 = vadd.f32 %v1088, %v1388
    %v1390 = vpop.f32.mrb[0].mxu0
    %v1391 = vpop.f32.mrb[0].mxu0
    %v1392 = vadd.f32 %v1088, %v1391
    %v1393 = vpop.f32.mrb[0].mxu0
    %1394 = vmatprep.mubr.bf16.mxu0 0
    %1395 = vmatmul.mubr.bf16.gmra.mrb[0].mxu0 %v1172
    %v1396 = vpop.f32.mrb[0].mxu0
    %v1397 = vadd.f32 %v1088, %v1396
    %v1398 = vpop.f32.mrb[0].mxu0
    %v1399 = vpop.f32.mrb[0].mxu0
    %v1400 = vadd.f32 %v1088, %v1399
    %v1401 = vpop.f32.mrb[0].mxu0
    %1402 = vmatprep.mubr.bf16.mxu0 0
    %1403 = vmatmul.mubr.bf16.gmra.mrb[0].mxu0 %v1175
    %v1404 = vpop.f32.mrb[0].mxu0
    %v1405 = vadd.f32 %v1088, %v1404
    %v1406 = vpop.f32.mrb[0].mxu0
    %v1407 = vpop.f32.mrb[0].mxu0
    %v1408 = vadd.f32 %v1088, %v1407
    %v1409 = vpop.f32.mrb[0].mxu0
    %1410 = vmatprep.mubr.bf16.mxu0 0
    %1411 = vmatmul.mubr.bf16.gmra.mrb[0].mxu0 %v1178
    %v1412 = vpop.f32.mrb[0].mxu0
    %v1413 = vadd.f32 %v1088, %v1412
    %v1414 = vpop.f32.mrb[0].mxu0
    %v1415 = vpop.f32.mrb[0].mxu0
    %v1416 = vadd.f32 %v1088, %v1415
    %v1417 = vpop.f32.mrb[0].mxu0
    %1418 = vmatprep.mubr.bf16.mxu0 0
    %1419 = vmatmul.mubr.bf16.gmra.mrb[0].mxu0 %v1181
    %v1420 = vpop.f32.mrb[0].mxu0
    %v1421 = vadd.f32 %v1088, %v1420
    %v1422 = vpop.f32.mrb[0].mxu0
    %v1423 = vpop.f32.mrb[0].mxu0
    %v1424 = vadd.f32 %v1088, %v1423
    %v1425 = vpop.f32.mrb[0].mxu0
    %1426 = vmatprep.mubr.bf16.mxu0 0
    %1427 = vmatmul.mubr.bf16.gmra.mrb[0].mxu0 %v1184
    %v1428 = vpop.f32.mrb[0].mxu0
    %v1429 = vadd.f32 %v1088, %v1428
    %v1430 = vpop.f32.mrb[0].mxu0
    %v1431 = vpop.f32.mrb[0].mxu0
    %v1432 = vadd.f32 %v1088, %v1431
    %v1433 = vpop.f32.mrb[0].mxu0
    %1434 = vmatprep.mubr.bf16.mxu0 0
    %1435 = vmatmul.mubr.bf16.gmra.mrb[0].mxu0 %v1187
    %v1436 = vpop.f32.mrb[0].mxu0
    %v1437 = vadd.f32 %v1088, %v1436
    %v1438 = vpop.f32.mrb[0].mxu0
    %v1439 = vpop.f32.mrb[0].mxu0
    %v1440 = vadd.f32 %v1088, %v1439
    %v1441 = vpop.f32.mrb[0].mxu0
    %1442 = vmatprep.mubr.bf16.mxu0 0
    %1443 = vmatmul.mubr.bf16.gmra.mrb[0].mxu0 %v1190
    %v1444 = vpop.f32.mrb[0].mxu0
    %v1445 = vadd.f32 %v1088, %v1444
    %v1446 = vpop.f32.mrb[0].mxu0
    %v1447 = vpop.f32.mrb[0].mxu0
    %v1448 = vadd.f32 %v1088, %v1447
    %v1449 = vpop.f32.mrb[0].mxu0
    %1450 = vmatprep.mubr.bf16.mxu0 0
    %1451 = vmatmul.mubr.bf16.gmra.mrb[0].mxu0 %v1193
    %v1452 = vpop.f32.mrb[0].mxu0
    %v1453 = vadd.f32 %v1088, %v1452
    %v1454 = vpop.f32.mrb[0].mxu0
    %v1455 = vpop.f32.mrb[0].mxu0
    %v1456 = vadd.f32 %v1088, %v1455
    %v1457 = vpop.f32.mrb[0].mxu0
    %1458 = vmatprep.mubr.bf16.mxu0 0
    %1459 = vmatmul.mubr.bf16.gmra.mrb[0].mxu0 %v1196
    %v1460 = vpop.f32.mrb[0].mxu0
    %v1461 = vadd.f32 %v1088, %v1460
    %v1462 = vpop.f32.mrb[0].mxu0
    %v1463 = vpop.f32.mrb[0].mxu0
    %v1464 = vadd.f32 %v1088, %v1463
    %v1465 = vpop.f32.mrb[0].mxu0
    %1466 = vmatprep.mubr.bf16.mxu0 0
    %1467 = vmatmul.mubr.bf16.gmra.mrb[0].mxu0 %v1199
    %v1468 = vpop.f32.mrb[0].mxu0
    %v1469 = vadd.f32 %v1088, %v1468
    %v1470 = vpop.f32.mrb[0].mxu0
    %v1471 = vpop.f32.mrb[0].mxu0
    %v1472 = vadd.f32 %v1088, %v1471
    %v1473 = vpop.f32.mrb[0].mxu0
    %1474 = vmatprep.mubr.bf16.mxu0 0
    %1475 = vmatmul.mubr.bf16.gmra.mrb[0].mxu0 %v1202
    %v1476 = vpop.f32.mrb[0].mxu0
    %v1477 = vadd.f32 %v1088, %v1476
    %v1478 = vpop.f32.mrb[0].mxu0
    %v1479 = vpop.f32.mrb[0].mxu0
    %v1480 = vadd.f32 %v1088, %v1479
    %v1481 = vpop.f32.mrb[0].mxu0
    %1482 = vmatprep.mubr.bf16.mxu0 0
    %1483 = vmatmul.mubr.bf16.gmra.mrb[0].mxu0 %v1205
    %v1484 = vpop.f32.mrb[0].mxu0
    %v1485 = vadd.f32 %v1088, %v1484
    %v1486 = vpop.f32.mrb[0].mxu0
    %v1487 = vpop.f32.mrb[0].mxu0
    %v1488 = vadd.f32 %v1088, %v1487
    %v1489 = vpop.f32.mrb[0].mxu0
    %1490 = vmatprep.mubr.bf16.mxu0 0
    %1491 = vmatmul.mubr.bf16.gmra.mrb[0].mxu0 %v1208
    %v1492 = vpop.f32.mrb[0].mxu0
    %v1493 = vadd.f32 %v1088, %v1492
    %v1494 = vpop.f32.mrb[0].mxu0
    %v1495 = vpop.f32.mrb[0].mxu0
    %v1496 = vadd.f32 %v1088, %v1495
    %v1497 = vpop.f32.mrb[0].mxu0
    %1498 = vdwg.mxu0
    %v1499 = vmax.f32 %v1245, 0.0
    %v1500 = vmax.f32 %v1248, 0.0
    %v1501 = vmax.f32 %v1253, 0.0
    %v1502 = vmax.f32 %v1256, 0.0
    %v1503 = vmax.f32 %v1261, 0.0
    %v1504 = vmax.f32 %v1264, 0.0
    %v1505 = vmax.f32 %v1269, 0.0
    %v1506 = vmax.f32 %v1272, 0.0
    %v1507 = vmax.f32 %v1277, 0.0
    %v1508 = vmax.f32 %v1280, 0.0
    %v1509 = vmax.f32 %v1285, 0.0
    %v1510 = vmax.f32 %v1288, 0.0
    %v1511 = vmax.f32 %v1293, 0.0
    %v1512 = vmax.f32 %v1296, 0.0
    %v1513 = vmax.f32 %v1301, 0.0
    %v1514 = vmax.f32 %v1304, 0.0
    %v1515 = vmax.f32 %v1309, 0.0
    %v1516 = vmax.f32 %v1312, 0.0
    %v1517 = vmax.f32 %v1317, 0.0
    %v1518 = vmax.f32 %v1320, 0.0
    %v1519 = vmax.f32 %v1325, 0.0
    %v1520 = vmax.f32 %v1328, 0.0
    %v1521 = vmax.f32 %v1333, 0.0
    %v1522 = vmax.f32 %v1336, 0.0
    %v1523 = vmax.f32 %v1341, 0.0
    %v1524 = vmax.f32 %v1344, 0.0
    %v1525 = vmax.f32 %v1349, 0.0
    %v1526 = vmax.f32 %v1352, 0.0
    %v1527 = vmax.f32 %v1357, 0.0
    %v1528 = vmax.f32 %v1360, 0.0
    %v1529 = vmax.f32 %v1365, 0.0
    %v1530 = vmax.f32 %v1368, 0.0
    %v1531 = vmax.f32 %v1373, 0.0
    %v1532 = vmax.f32 %v1376, 0.0
    %v1533 = vmax.f32 %v1381, 0.0
    %v1534 = vmax.f32 %v1384, 0.0
    %v1535 = vmax.f32 %v1389, 0.0
    %v1536 = vmax.f32 %v1392, 0.0
    %v1537 = vmax.f32 %v1397, 0.0
    %v1538 = vmax.f32 %v1400, 0.0
    %v1539 = vmax.f32 %v1405, 0.0
    %v1540 = vmax.f32 %v1408, 0.0
    %v1541 = vmax.f32 %v1413, 0.0
    %v1542 = vmax.f32 %v1416, 0.0
    %v1543 = vmax.f32 %v1421, 0.0
    %v1544 = vmax.f32 %v1424, 0.0
    %v1545 = vmax.f32 %v1429, 0.0
    %v1546 = vmax.f32 %v1432, 0.0
    %v1547 = vmax.f32 %v1437, 0.0
    %v1548 = vmax.f32 %v1440, 0.0
    %v1549 = vmax.f32 %v1445, 0.0
    %v1550 = vmax.f32 %v1448, 0.0
    %v1551 = vmax.f32 %v1453, 0.0
    %v1552 = vmax.f32 %v1456, 0.0
    %v1553 = vmax.f32 %v1461, 0.0
    %v1554 = vmax.f32 %v1464, 0.0
    %v1555 = vmax.f32 %v1469, 0.0
    %v1556 = vmax.f32 %v1472, 0.0
    %v1557 = vmax.f32 %v1477, 0.0
    %v1558 = vmax.f32 %v1480, 0.0
    %v1559 = vmax.f32 %v1485, 0.0
    %v1560 = vmax.f32 %v1488, 0.0
    %v1561 = vmax.f32 %v1493, 0.0
    %v1562 = vmax.f32 %v1496, 0.0
    %v1563 = vpack.c.bf16 %v1500, %v1499
    %v1564 = vpack.c.bf16 %v1502, %v1501
    %v1565 = vpack.c.bf16 %v1504, %v1503
    %v1566 = vpack.c.bf16 %v1506, %v1505
    %v1567 = vpack.c.bf16 %v1508, %v1507
    %v1568 = vpack.c.bf16 %v1510, %v1509
    %v1569 = vpack.c.bf16 %v1512, %v1511
    %v1570 = vpack.c.bf16 %v1514, %v1513
    %v1571 = vpack.c.bf16 %v1516, %v1515
    %v1572 = vpack.c.bf16 %v1518, %v1517
    %v1573 = vpack.c.bf16 %v1520, %v1519
    %v1574 = vpack.c.bf16 %v1522, %v1521
    %v1575 = vpack.c.bf16 %v1524, %v1523
    %v1576 = vpack.c.bf16 %v1526, %v1525
    %v1577 = vpack.c.bf16 %v1528, %v1527
    %v1578 = vpack.c.bf16 %v1530, %v1529
    %v1579 = vpack.c.bf16 %v1532, %v1531
    %v1580 = vpack.c.bf16 %v1534, %v1533
    %v1581 = vpack.c.bf16 %v1536, %v1535
    %v1582 = vpack.c.bf16 %v1538, %v1537
    %v1583 = vpack.c.bf16 %v1540, %v1539
    %v1584 = vpack.c.bf16 %v1542, %v1541
    %v1585 = vpack.c.bf16 %v1544, %v1543
    %v1586 = vpack.c.bf16 %v1546, %v1545
    %v1587 = vpack.c.bf16 %v1548, %v1547
    %v1588 = vpack.c.bf16 %v1550, %v1549
    %v1589 = vpack.c.bf16 %v1552, %v1551
    %v1590 = vpack.c.bf16 %v1554, %v1553
    %v1591 = vpack.c.bf16 %v1556, %v1555
    %v1592 = vpack.c.bf16 %v1558, %v1557
    %v1593 = vpack.c.bf16 %v1560, %v1559
    %v1594 = vpack.c.bf16 %v1562, %v1561
    %v1595 = vld [vmem:[%s4] sm:$0x1]
    %1597 = vset.pattern.permute.xlu0 0
    %1598 = vperm.xlu0 %1597, %v25
    %v1599 = vpop.permute.xlu0 %1598
    %v1600 = vrot.slane %v1599, 3
    %v1603 = vsel %vm142, %v1595, 0
    %v1606 = vsel %vm142, %v1563, 0
    %v1609 = vsel %vm142, %v1564, 0
    %v1612 = vsel %vm142, %v1565, 0
    %v1615 = vsel %vm142, %v1566, 0
    %v1618 = vsel %vm142, %v1567, 0
    %v1621 = vsel %vm142, %v1568, 0
    %v1624 = vsel %vm142, %v1569, 0
    %v1627 = vsel %vm142, %v1570, 0
    %v1630 = vsel %vm142, %v1571, 0
    %v1633 = vsel %vm142, %v1572, 0
    %v1636 = vsel %vm142, %v1573, 0
    %v1639 = vsel %vm142, %v1574, 0
    %v1642 = vsel %vm142, %v1575, 0
    %v1645 = vsel %vm142, %v1576, 0
    %v1648 = vsel %vm142, %v1577, 0
    %v1651 = vsel %vm142, %v1578, 0
    %v1654 = vsel %vm142, %v1579, 0
    %v1657 = vsel %vm142, %v1580, 0
    %v1660 = vsel %vm142, %v1581, 0
    %v1663 = vsel %vm142, %v1582, 0
    %v1666 = vsel %vm142, %v1583, 0
    %v1669 = vsel %vm142, %v1584, 0
    %v1672 = vsel %vm142, %v1585, 0
    %v1675 = vsel %vm142, %v1586, 0
    %v1678 = vsel %vm142, %v1587, 0
    %v1681 = vsel %vm142, %v1588, 0
    %v1684 = vsel %vm142, %v1589, 0
    %v1687 = vsel %vm142, %v1590, 0
    %v1690 = vsel %vm142, %v1591, 0
    %v1693 = vsel %vm142, %v1592, 0
    %v1696 = vsel %vm142, %v1593, 0
    %v1699 = vsel %vm142, %v1594, 0
    %1701 = vmatprep.subr.bf16.mxu0 0
    %1702 = vmatpush1.bf16.xpose.msra.mxu0 %v1606
    %1703 = vmatprep.subr.bf16.mxu0 0
    %1704 = vmatpush1.bf16.xpose.msra.mxu0 %v1609
    %1705 = vmatprep.subr.bf16.mxu0 0
    %1706 = vmatpush1.bf16.xpose.msra.mxu0 %v1612
    %1707 = vmatprep.subr.bf16.mxu0 0
    %1708 = vmatpush1.bf16.xpose.msra.mxu0 %v1615
    %1709 = vmatprep.subr.bf16.mxu0 0
    %1710 = vmatpush1.bf16.xpose.msra.mxu0 %v1618
    %1711 = vmatprep.subr.bf16.mxu0 0
    %1712 = vmatpush1.bf16.xpose.msra.mxu0 %v1621
    %1713 = vmatprep.subr.bf16.mxu0 0
    %1714 = vmatpush1.bf16.xpose.msra.mxu0 %v1624
    %1715 = vmatprep.subr.bf16.mxu0 0
    %1716 = vmatpush1.bf16.xpose.msra.mxu0 %v1627
    %1717 = vmatprep.subr.bf16.mxu0 0
    %1718 = vmatpush1.bf16.xpose.msra.mxu0 %v1630
    %1719 = vmatprep.subr.bf16.mxu0 0
    %1720 = vmatpush1.bf16.xpose.msra.mxu0 %v1633
    %1721 = vmatprep.subr.bf16.mxu0 0
    %1722 = vmatpush1.bf16.xpose.msra.mxu0 %v1636
    %1723 = vmatprep.subr.bf16.mxu0 0
    %1724 = vmatpush1.bf16.xpose.msra.mxu0 %v1639
    %1725 = vmatprep.subr.bf16.mxu0 0
    %1726 = vmatpush1.bf16.xpose.msra.mxu0 %v1642
    %1727 = vmatprep.subr.bf16.mxu0 0
    %1728 = vmatpush1.bf16.xpose.msra.mxu0 %v1645
    %1729 = vmatprep.subr.bf16.mxu0 0
    %1730 = vmatpush1.bf16.xpose.msra.mxu0 %v1648
    %1731 = vmatprep.subr.bf16.mxu0 0
    %1732 = vmatpush1.bf16.xpose.msra.mxu0 %v1651
    %1733 = vmatprep.mubr.bf16.mxu0 0
    %1734 = vmatmul.mubr.bf16.gmra.mrb[0].mxu0 %v1603
    %v1735 = vpop.f32.mrb[0].mxu0
    %v1736 = vadd.f32 %v1600, %v1735
    %v1737 = vpop.f32.mrb[0].mxu0
    %v1738 = vadd.f32 %v1600, %v1737
    %v1739 = vpop.f32.mrb[0].mxu0
    %v1740 = vpop.f32.mrb[0].mxu0
    %1741 = vdwg.mxu0
    %1742 = vmatprep.subr.bf16.mxu0 0
    %1743 = vmatpush1.bf16.xpose.msra.mxu0 %v1654
    %1744 = vmatprep.subr.bf16.mxu0 0
    %1745 = vmatpush1.bf16.xpose.msra.mxu0 %v1657
    %1746 = vmatprep.subr.bf16.mxu0 0
    %1747 = vmatpush1.bf16.xpose.msra.mxu0 %v1660
    %1748 = vmatprep.subr.bf16.mxu0 0
    %1749 = vmatpush1.bf16.xpose.msra.mxu0 %v1663
    %1750 = vmatprep.subr.bf16.mxu0 0
    %1751 = vmatpush1.bf16.xpose.msra.mxu0 %v1666
    %1752 = vmatprep.subr.bf16.mxu0 0
    %1753 = vmatpush1.bf16.xpose.msra.mxu0 %v1669
    %1754 = vmatprep.subr.bf16.mxu0 0
    %1755 = vmatpush1.bf16.xpose.msra.mxu0 %v1672
    %1756 = vmatprep.subr.bf16.mxu0 0
    %1757 = vmatpush1.bf16.xpose.msra.mxu0 %v1675
    %1758 = vmatprep.subr.bf16.mxu0 0
    %1759 = vmatpush1.bf16.xpose.msra.mxu0 %v1678
    %1760 = vmatprep.subr.bf16.mxu0 0
    %1761 = vmatpush1.bf16.xpose.msra.mxu0 %v1681
    %1762 = vmatprep.subr.bf16.mxu0 0
    %1763 = vmatpush1.bf16.xpose.msra.mxu0 %v1684
    %1764 = vmatprep.subr.bf16.mxu0 0
    %1765 = vmatpush1.bf16.xpose.msra.mxu0 %v1687
    %1766 = vmatprep.subr.bf16.mxu0 0
    %1767 = vmatpush1.bf16.xpose.msra.mxu0 %v1690
    %1768 = vmatprep.subr.bf16.mxu0 0
    %1769 = vmatpush1.bf16.xpose.msra.mxu0 %v1693
    %1770 = vmatprep.subr.bf16.mxu0 0
    %1771 = vmatpush1.bf16.xpose.msra.mxu0 %v1696
    %1772 = vmatprep.subr.bf16.mxu0 0
    %1773 = vmatpush1.bf16.xpose.msra.mxu0 %v1699
    %1774 = vmatprep.mubr.bf16.mxu0 0
    %1775 = vmatmul.mubr.bf16.gmra.mrb[0].mxu0 %v1603
    %v1776 = vpop.f32.mrb[0].mxu0
    %v1777 = vadd.f32 %v1600, %v1776
    %v1778 = vpop.f32.mrb[0].mxu0
    %v1779 = vadd.f32 %v1600, %v1778
    %v1780 = vpop.f32.mrb[0].mxu0
    %v1781 = vpop.f32.mrb[0].mxu0
    %1782 = vdwg.mxu0
    %v1787 = vcombine.low %v1736, %v1738
    %v1788 = vcombine.low %v1777, %v1779
    %v1790 = vunpack.c.l.s4 1966171168
    %v1791 = vunpack.c.0.s8 %v1790
    %v1792 = vlaneseq
    %v1793 = vshrl.u32 %v1792, 7
    %v1794 = vsub.s32 %v1791, %v1793
    %v1795 = vrot.slane %v1787, %v1794
    %v1797 = vunpack.c.l.s4 1966171168
    %v1798 = vunpack.c.0.s8 %v1797
    %v1799 = vlaneseq
    %v1800 = vshrl.u32 %v1799, 7
    %v1801 = vsub.s32 %v1798, %v1800
    %v1802 = vrot.slane %v1788, %v1801
    %v1803 = vcombine.low %v1795, %v1802
    %v1805 = vunpack.c.l.s4 1966171168
    %v1806 = vunpack.c.0.s8 %v1805
    %v1807 = vlaneseq
    %v1808 = vshrl.u32 %v1807, 7
    %v1809 = vsub.s32 %v1806, %v1808
    %v1810 = vrot.slane %v1803, %v1809
    %v1812 = vlaneseq
    %vm1813 = vcmp.ge.s32.totalorder %v1812, 0
    %vm1814 = vcmp.lt.s32.totalorder %v1812, 512
    %vm1815 = vmand %vm1813, %vm1814
    %1816 = vst.msk [vmem:[#allocation2] sm:$0xf] %vm1815, %v1810
    // Predicated region
    $region26: #{tpu_custom_call.1} parent=1 // pred_check
      _
    $region27: #{tpu_custom_call.1} parent=1 // pred_check_branch
      %1818 = sbr.rel (0) target = $region29
    $region28: #{tpu_custom_call.1} parent=1 // pred_region
      %s1820 = ssub.s32 64, 64
      %1821 = vsyncadd [#allocation3], %s1820
      %s1823 = sshll.u32 [#allocation2], 4
      %s1824 = int_to_ptr.vmem [resolvable:$true] %s1823
      %1826 = dma.vmem_to_hbm [thread:$0]  %s1824, 64, %s6, [#allocation3]
    $region29: #{tpu_custom_call.1} parent=1 // pred_fallthru
      _
    // Predicated region
    $region30: #{tpu_custom_call.1} parent=1 // pred_check
      _
    $region31: #{tpu_custom_call.1} parent=1 // pred_check_branch
      %1828 = sbr.rel (0) target = $region33
    $region32: #{tpu_custom_call.1} parent=1 // pred_region
      %1829 = dma.done [#allocation3], 64
    $region33: #{tpu_custom_call.1} parent=1 // pred_fallthru
      _
    %1830 = vsyncpa [#allocation3], 1

</llo_original>
